<compile_context>
chip_gen: v5e
topology: v5e:2x2
jax: 0.10.0
libtpu: 0.0.40
codegen_flags: <defaults>
</compile_context>

<pallas_src>
import functools

import jax
import jax.numpy as jnp
import numpy as np
from jax.experimental import pallas as pl
from jax.experimental.pallas import tpu as pltpu


def _csam_kernel(params_ref, x_ref, o_ref, xpad_ref, *, C, H, W):
    # params_ref: SMEM f32[29] = [conv_w(27) in (dc, dh, dw) order, conv_b, gamma]
    # x_ref     : VMEM (Bt, C, H, W)       input block
    # o_ref     : VMEM (Bt, C, H, W)       output block
    # xpad_ref  : VMEM (Bt, C+2, H+2, W+2) f32 scratch (zero halo + interior copy)
    x = x_ref[...].astype(jnp.float32)

    # Build the zero-padded volume in VMEM.  (Scratch persists across grid
    # steps, but megacore shards the grid across cores, so re-zero every step.)
    xpad_ref[...] = jnp.zeros_like(xpad_ref)
    xpad_ref[:, 1:1 + C, 1:1 + H, 1:1 + W] = x

    acc = jnp.zeros(x.shape, jnp.float32)
    # 3x3x3 cross-correlation (PyTorch conv convention).  The (sublane, lane)
    # shifts are hoisted: only 9 shifted loads; the dc offsets below are
    # leading-axis slices (free — no data movement).
    for dh in range(3):
        for dw in range(3):
            shifted = xpad_ref[:, :, dh:dh + H, dw:dw + W]      # (Bt, C+2, H, W)
            for dc in range(3):
                w = params_ref[dc * 9 + dh * 3 + dw]
                acc = acc + w * shifted[:, dc:dc + C]

    acc = acc + params_ref[27]                                  # conv bias
    # sigmoid: exp issues on the EUP slot; exact reciprocal keeps 1e-5 accuracy.
    att = params_ref[28] * pl.reciprocal(1.0 + jnp.exp(-acc), approx=False)
    o_ref[...] = (x * att + x).astype(o_ref.dtype)              # x * out + x


def _pick_batch_tile(B, C, H, W, itemsize):
    """Batch-tile so blocks are a few MiB, but keep >= 2 grid steps (megacore)."""
    per_b = max(C * H * W * itemsize, 1)
    bt = max(1, min(B, (4 * 1024 * 1024) // per_b))
    if B >= 2:
        bt = max(1, min(bt, B // 2))
    while B % bt:
        bt -= 1
    return bt


def csam_forward(x, conv_w, conv_b, gamma):
    """x: (B, C, H, W). conv_w: (1,1,3,3,3), conv_b: (1,), gamma: (1,)."""
    B, C, H, W = x.shape
    params = jnp.concatenate(
        [conv_w.reshape(-1), conv_b.reshape(-1), gamma.reshape(-1)]
    ).astype(jnp.float32)

    bt = _pick_batch_tile(B, C, H, W, x.dtype.itemsize)
    grid = (B // bt,)

    block_bytes = bt * C * H * W * x.dtype.itemsize
    scratch_bytes = bt * (C + 2) * (H + 2) * (W + 2) * 4
    # in + out blocks are double-buffered by the auto-pipeline.
    vmem_need = 4 * block_bytes + scratch_bytes
    vmem_limit = None
    if vmem_need > 24 * 1024 * 1024:
        # For very large volumes, halo-tile H instead of just raising the limit.
        vmem_limit = int(min(vmem_need * 3 // 2, 64 * 1024 * 1024))

    kernel = functools.partial(_csam_kernel, C=C, H=H, W=W)
    return pl.pallas_call(
        kernel,
        out_shape=jax.ShapeDtypeStruct((B, C, H, W), x.dtype),
        grid=grid,
        in_specs=[
            pl.BlockSpec(memory_space=pltpu.MemorySpace.SMEM),        # params
            pl.BlockSpec((bt, C, H, W), lambda b: (b, 0, 0, 0)),      # x (single HBM read)
        ],
        out_specs=pl.BlockSpec((bt, C, H, W), lambda b: (b, 0, 0, 0)),
        scratch_shapes=[pltpu.VMEM((bt, C + 2, H + 2, W + 2), jnp.float32)],
        compiler_params=pltpu.CompilerParams(
            dimension_semantics=("parallel",),
            vmem_limit_bytes=vmem_limit,
        ),
    )(params, x)


def csam_reference(x, conv_w, conv_b, gamma):
    """Pure-JAX reference mirroring the PyTorch forward exactly."""
    B, C, H, W = x.shape
    vol = x[:, None, :, :, :]  # (B, 1, C, H, W)  == x.unsqueeze(1)
    conv = jax.lax.conv_general_dilated(
        vol, conv_w, window_strides=(1, 1, 1),
        padding=((1, 1), (1, 1), (1, 1)),
        dimension_numbers=("NCDHW", "OIDHW", "NCDHW"),
    ) + conv_b.reshape(1, 1, 1, 1, 1)
    out = gamma.reshape(()) * jax.nn.sigmoid(conv)
    out = out.reshape(B, C, H, W)
    return x * out + x


if __name__ == "__main__":
    B, C, H, W = 2, 4, 16, 16

    key = jax.random.PRNGKey(0)
    kx, kw, kb = jax.random.split(key, 3)
    x = jax.random.normal(kx, (B, C, H, W), dtype=jnp.float32)

    # Deterministic parameter init (shapes from nn.Conv3d(1,1,3,1,1) + gamma).
    fan_in = 27.0
    bound = 1.0 / np.sqrt(fan_in)
    conv_w = jax.random.uniform(kw, (1, 1, 3, 3, 3), jnp.float32, -bound, bound)
    conv_b = jax.random.uniform(kb, (1,), jnp.float32, -bound, bound)
    # NOTE: nn.Parameter(torch.zeros(1)) would make the forward a no-op; use a
    # nonzero deterministic gamma so the kernel path is actually exercised.
    gamma = jnp.array([0.5], dtype=jnp.float32)

    y = csam_forward(x, conv_w, conv_b, gamma)
    jax.block_until_ready(y)

    y_ref = csam_reference(x, conv_w, conv_b, gamma)
    if not np.allclose(np.asarray(y), np.asarray(y_ref), atol=1e-5, rtol=1e-5):
        raise AssertionError("Pallas CSAM kernel does not match reference")

    print("KERNEL_OK")
</pallas_src>

<mosaic_0001>
module attributes {stable_mosaic.version = 11 : i64} {
  func.func @_csam_kernel(%arg0: i32, %arg1: memref<29xf32, #tpu.memory_space<smem>>, %arg2: memref<1x4x16x16xf32, #tpu.memory_space<vmem>>, %arg3: memref<1x4x16x16xf32, #tpu.memory_space<vmem>>, %arg4: memref<1x6x18x18xf32, #tpu.memory_space<vmem>>) attributes {dimension_semantics = [#tpu.dimension_semantics<parallel>], iteration_bounds = array<i64: 2>, scalar_prefetch = 0 : i64, scratch_operands = 1 : i64, tpu.core_type = #tpu.core_type<tc>, window_params = [{transform_indices = @transform_0, window_bounds = array<i64: 29>}, {transform_indices = @transform_1, window_bounds = array<i64: 1, 4, 16, 16>}, {transform_indices = @transform_2, window_bounds = array<i64: 1, 4, 16, 16>}]} {
    %c0 = arith.constant 0 : index
    %c0_0 = arith.constant 0 : index
    %c0_1 = arith.constant 0 : index
    %c0_2 = arith.constant 0 : index
    %0 = vector.load %arg2[%c0, %c0_0, %c0_1, %c0_2] : memref<1x4x16x16xf32, #tpu.memory_space<vmem>>, vector<1x4x16x16xf32>
    %cst = arith.constant 0.000000e+00 : f32
    %1 = vector.broadcast %cst : f32 to vector<1x6x18x18xf32>
    %c0_3 = arith.constant 0 : index
    %c0_4 = arith.constant 0 : index
    %c0_5 = arith.constant 0 : index
    %c0_6 = arith.constant 0 : index
    %2 = vector.load %arg4[%c0_3, %c0_4, %c0_5, %c0_6] : memref<1x6x18x18xf32, #tpu.memory_space<vmem>>, vector<1x6x18x18xf32>
    tpu.vector_store %arg4[%c0_3, %c0_4, %c0_5, %c0_6], %1 {strides = array<i32>} : memref<1x6x18x18xf32, #tpu.memory_space<vmem>>, vector<1x6x18x18xf32>,
    %c0_7 = arith.constant 0 : index
    %c1 = arith.constant 1 : index
    %c1_8 = arith.constant 1 : index
    %c1_9 = arith.constant 1 : index
    %3 = vector.load %arg4[%c0_7, %c1, %c1_8, %c1_9] : memref<1x6x18x18xf32, #tpu.memory_space<vmem>>, vector<1x4x16x16xf32>
    tpu.vector_store %arg4[%c0_7, %c1, %c1_8, %c1_9], %0 {strides = array<i32>} : memref<1x6x18x18xf32, #tpu.memory_space<vmem>>, vector<1x4x16x16xf32>,
    %cst_10 = arith.constant 0.000000e+00 : f32
    %4 = vector.broadcast %cst_10 : f32 to vector<1x4x16x16xf32>
    %c0_11 = arith.constant 0 : index
    %c0_12 = arith.constant 0 : index
    %c0_13 = arith.constant 0 : index
    %c0_14 = arith.constant 0 : index
    %5 = vector.load %arg4[%c0_11, %c0_12, %c0_13, %c0_14] : memref<1x6x18x18xf32, #tpu.memory_space<vmem>>, vector<1x6x16x16xf32>
    %c0_15 = arith.constant 0 : index
    %6 = memref.load %arg1[%c0_15] : memref<29xf32, #tpu.memory_space<smem>>
    %7 = vector.extract_strided_slice %5 {offsets = [0, 0, 0, 0], sizes = [1, 4, 16, 16], strides = [1, 1, 1, 1]} : vector<1x6x16x16xf32> to vector<1x4x16x16xf32>
    %8 = vector.broadcast %6 : f32 to vector<1x4x16x16xf32>
    %9 = arith.mulf %8, %7 : vector<1x4x16x16xf32>
    %10 = arith.addf %4, %9 : vector<1x4x16x16xf32>
    %c9 = arith.constant 9 : index
    %11 = memref.load %arg1[%c9] : memref<29xf32, #tpu.memory_space<smem>>
    %12 = vector.extract_strided_slice %5 {offsets = [0, 1, 0, 0], sizes = [1, 4, 16, 16], strides = [1, 1, 1, 1]} : vector<1x6x16x16xf32> to vector<1x4x16x16xf32>
    %13 = vector.broadcast %11 : f32 to vector<1x4x16x16xf32>
    %14 = arith.mulf %13, %12 : vector<1x4x16x16xf32>
    %15 = arith.addf %10, %14 : vector<1x4x16x16xf32>
    %c18 = arith.constant 18 : index
    %16 = memref.load %arg1[%c18] : memref<29xf32, #tpu.memory_space<smem>>
    %17 = vector.extract_strided_slice %5 {offsets = [0, 2, 0, 0], sizes = [1, 4, 16, 16], strides = [1, 1, 1, 1]} : vector<1x6x16x16xf32> to vector<1x4x16x16xf32>
    %18 = vector.broadcast %16 : f32 to vector<1x4x16x16xf32>
    %19 = arith.mulf %18, %17 : vector<1x4x16x16xf32>
    %20 = arith.addf %15, %19 : vector<1x4x16x16xf32>
    %c0_16 = arith.constant 0 : index
    %c0_17 = arith.constant 0 : index
    %c0_18 = arith.constant 0 : index
    %c1_19 = arith.constant 1 : index
    %21 = vector.load %arg4[%c0_16, %c0_17, %c0_18, %c1_19] : memref<1x6x18x18xf32, #tpu.memory_space<vmem>>, vector<1x6x16x16xf32>
    %c1_20 = arith.constant 1 : index
    %22 = memref.load %arg1[%c1_20] : memref<29xf32, #tpu.memory_space<smem>>
    %23 = vector.extract_strided_slice %21 {offsets = [0, 0, 0, 0], sizes = [1, 4, 16, 16], strides = [1, 1, 1, 1]} : vector<1x6x16x16xf32> to vector<1x4x16x16xf32>
    %24 = vector.broadcast %22 : f32 to vector<1x4x16x16xf32>
    %25 = arith.mulf %24, %23 : vector<1x4x16x16xf32>
    %26 = arith.addf %20, %25 : vector<1x4x16x16xf32>
    %c10 = arith.constant 10 : index
    %27 = memref.load %arg1[%c10] : memref<29xf32, #tpu.memory_space<smem>>
    %28 = vector.extract_strided_slice %21 {offsets = [0, 1, 0, 0], sizes = [1, 4, 16, 16], strides = [1, 1, 1, 1]} : vector<1x6x16x16xf32> to vector<1x4x16x16xf32>
    %29 = vector.broadcast %27 : f32 to vector<1x4x16x16xf32>
    %30 = arith.mulf %29, %28 : vector<1x4x16x16xf32>
    %31 = arith.addf %26, %30 : vector<1x4x16x16xf32>
    %c19 = arith.constant 19 : index
    %32 = memref.load %arg1[%c19] : memref<29xf32, #tpu.memory_space<smem>>
    %33 = vector.extract_strided_slice %21 {offsets = [0, 2, 0, 0], sizes = [1, 4, 16, 16], strides = [1, 1, 1, 1]} : vector<1x6x16x16xf32> to vector<1x4x16x16xf32>
    %34 = vector.broadcast %32 : f32 to vector<1x4x16x16xf32>
    %35 = arith.mulf %34, %33 : vector<1x4x16x16xf32>
    %36 = arith.addf %31, %35 : vector<1x4x16x16xf32>
    %c0_21 = arith.constant 0 : index
    %c0_22 = arith.constant 0 : index
    %c0_23 = arith.constant 0 : index
    %c2 = arith.constant 2 : index
    %37 = vector.load %arg4[%c0_21, %c0_22, %c0_23, %c2] : memref<1x6x18x18xf32, #tpu.memory_space<vmem>>, vector<1x6x16x16xf32>
    %c2_24 = arith.constant 2 : index
    %38 = memref.load %arg1[%c2_24] : memref<29xf32, #tpu.memory_space<smem>>
    %39 = vector.extract_strided_slice %37 {offsets = [0, 0, 0, 0], sizes = [1, 4, 16, 16], strides = [1, 1, 1, 1]} : vector<1x6x16x16xf32> to vector<1x4x16x16xf32>
    %40 = vector.broadcast %38 : f32 to vector<1x4x16x16xf32>
    %41 = arith.mulf %40, %39 : vector<1x4x16x16xf32>
    %42 = arith.addf %36, %41 : vector<1x4x16x16xf32>
    %c11 = arith.constant 11 : index
    %43 = memref.load %arg1[%c11] : memref<29xf32, #tpu.memory_space<smem>>
    %44 = vector.extract_strided_slice %37 {offsets = [0, 1, 0, 0], sizes = [1, 4, 16, 16], strides = [1, 1, 1, 1]} : vector<1x6x16x16xf32> to vector<1x4x16x16xf32>
    %45 = vector.broadcast %43 : f32 to vector<1x4x16x16xf32>
    %46 = arith.mulf %45, %44 : vector<1x4x16x16xf32>
    %47 = arith.addf %42, %46 : vector<1x4x16x16xf32>
    %c20 = arith.constant 20 : index
    %48 = memref.load %arg1[%c20] : memref<29xf32, #tpu.memory_space<smem>>
    %49 = vector.extract_strided_slice %37 {offsets = [0, 2, 0, 0], sizes = [1, 4, 16, 16], strides = [1, 1, 1, 1]} : vector<1x6x16x16xf32> to vector<1x4x16x16xf32>
    %50 = vector.broadcast %48 : f32 to vector<1x4x16x16xf32>
    %51 = arith.mulf %50, %49 : vector<1x4x16x16xf32>
    %52 = arith.addf %47, %51 : vector<1x4x16x16xf32>
    %c0_25 = arith.constant 0 : index
    %c0_26 = arith.constant 0 : index
    %c1_27 = arith.constant 1 : index
    %c0_28 = arith.constant 0 : index
    %53 = vector.load %arg4[%c0_25, %c0_26, %c1_27, %c0_28] : memref<1x6x18x18xf32, #tpu.memory_space<vmem>>, vector<1x6x16x16xf32>
    %c3 = arith.constant 3 : index
    %54 = memref.load %arg1[%c3] : memref<29xf32, #tpu.memory_space<smem>>
    %55 = vector.extract_strided_slice %53 {offsets = [0, 0, 0, 0], sizes = [1, 4, 16, 16], strides = [1, 1, 1, 1]} : vector<1x6x16x16xf32> to vector<1x4x16x16xf32>
    %56 = vector.broadcast %54 : f32 to vector<1x4x16x16xf32>
    %57 = arith.mulf %56, %55 : vector<1x4x16x16xf32>
    %58 = arith.addf %52, %57 : vector<1x4x16x16xf32>
    %c12 = arith.constant 12 : index
    %59 = memref.load %arg1[%c12] : memref<29xf32, #tpu.memory_space<smem>>
    %60 = vector.extract_strided_slice %53 {offsets = [0, 1, 0, 0], sizes = [1, 4, 16, 16], strides = [1, 1, 1, 1]} : vector<1x6x16x16xf32> to vector<1x4x16x16xf32>
    %61 = vector.broadcast %59 : f32 to vector<1x4x16x16xf32>
    %62 = arith.mulf %61, %60 : vector<1x4x16x16xf32>
    %63 = arith.addf %58, %62 : vector<1x4x16x16xf32>
    %c21 = arith.constant 21 : index
    %64 = memref.load %arg1[%c21] : memref<29xf32, #tpu.memory_space<smem>>
    %65 = vector.extract_strided_slice %53 {offsets = [0, 2, 0, 0], sizes = [1, 4, 16, 16], strides = [1, 1, 1, 1]} : vector<1x6x16x16xf32> to vector<1x4x16x16xf32>
    %66 = vector.broadcast %64 : f32 to vector<1x4x16x16xf32>
    %67 = arith.mulf %66, %65 : vector<1x4x16x16xf32>
    %68 = arith.addf %63, %67 : vector<1x4x16x16xf32>
    %c0_29 = arith.constant 0 : index
    %c0_30 = arith.constant 0 : index
    %c1_31 = arith.constant 1 : index
    %c1_32 = arith.constant 1 : index
    %69 = vector.load %arg4[%c0_29, %c0_30, %c1_31, %c1_32] : memref<1x6x18x18xf32, #tpu.memory_space<vmem>>, vector<1x6x16x16xf32>
    %c4 = arith.constant 4 : index
    %70 = memref.load %arg1[%c4] : memref<29xf32, #tpu.memory_space<smem>>
    %71 = vector.extract_strided_slice %69 {offsets = [0, 0, 0, 0], sizes = [1, 4, 16, 16], strides = [1, 1, 1, 1]} : vector<1x6x16x16xf32> to vector<1x4x16x16xf32>
    %72 = vector.broadcast %70 : f32 to vector<1x4x16x16xf32>
    %73 = arith.mulf %72, %71 : vector<1x4x16x16xf32>
    %74 = arith.addf %68, %73 : vector<1x4x16x16xf32>
    %c13 = arith.constant 13 : index
    %75 = memref.load %arg1[%c13] : memref<29xf32, #tpu.memory_space<smem>>
    %76 = vector.extract_strided_slice %69 {offsets = [0, 1, 0, 0], sizes = [1, 4, 16, 16], strides = [1, 1, 1, 1]} : vector<1x6x16x16xf32> to vector<1x4x16x16xf32>
    %77 = vector.broadcast %75 : f32 to vector<1x4x16x16xf32>
    %78 = arith.mulf %77, %76 : vector<1x4x16x16xf32>
    %79 = arith.addf %74, %78 : vector<1x4x16x16xf32>
    %c22 = arith.constant 22 : index
    %80 = memref.load %arg1[%c22] : memref<29xf32, #tpu.memory_space<smem>>
    %81 = vector.extract_strided_slice %69 {offsets = [0, 2, 0, 0], sizes = [1, 4, 16, 16], strides = [1, 1, 1, 1]} : vector<1x6x16x16xf32> to vector<1x4x16x16xf32>
    %82 = vector.broadcast %80 : f32 to vector<1x4x16x16xf32>
    %83 = arith.mulf %82, %81 : vector<1x4x16x16xf32>
    %84 = arith.addf %79, %83 : vector<1x4x16x16xf32>
    %c0_33 = arith.constant 0 : index
    %c0_34 = arith.constant 0 : index
    %c1_35 = arith.constant 1 : index
    %c2_36 = arith.constant 2 : index
    %85 = vector.load %arg4[%c0_33, %c0_34, %c1_35, %c2_36] : memref<1x6x18x18xf32, #tpu.memory_space<vmem>>, vector<1x6x16x16xf32>
    %c5 = arith.constant 5 : index
    %86 = memref.load %arg1[%c5] : memref<29xf32, #tpu.memory_space<smem>>
    %87 = vector.extract_strided_slice %85 {offsets = [0, 0, 0, 0], sizes = [1, 4, 16, 16], strides = [1, 1, 1, 1]} : vector<1x6x16x16xf32> to vector<1x4x16x16xf32>
    %88 = vector.broadcast %86 : f32 to vector<1x4x16x16xf32>
    %89 = arith.mulf %88, %87 : vector<1x4x16x16xf32>
    %90 = arith.addf %84, %89 : vector<1x4x16x16xf32>
    %c14 = arith.constant 14 : index
    %91 = memref.load %arg1[%c14] : memref<29xf32, #tpu.memory_space<smem>>
    %92 = vector.extract_strided_slice %85 {offsets = [0, 1, 0, 0], sizes = [1, 4, 16, 16], strides = [1, 1, 1, 1]} : vector<1x6x16x16xf32> to vector<1x4x16x16xf32>
    %93 = vector.broadcast %91 : f32 to vector<1x4x16x16xf32>
    %94 = arith.mulf %93, %92 : vector<1x4x16x16xf32>
    %95 = arith.addf %90, %94 : vector<1x4x16x16xf32>
    %c23 = arith.constant 23 : index
    %96 = memref.load %arg1[%c23] : memref<29xf32, #tpu.memory_space<smem>>
    %97 = vector.extract_strided_slice %85 {offsets = [0, 2, 0, 0], sizes = [1, 4, 16, 16], strides = [1, 1, 1, 1]} : vector<1x6x16x16xf32> to vector<1x4x16x16xf32>
    %98 = vector.broadcast %96 : f32 to vector<1x4x16x16xf32>
    %99 = arith.mulf %98, %97 : vector<1x4x16x16xf32>
    %100 = arith.addf %95, %99 : vector<1x4x16x16xf32>
    %c0_37 = arith.constant 0 : index
    %c0_38 = arith.constant 0 : index
    %c2_39 = arith.constant 2 : index
    %c0_40 = arith.constant 0 : index
    %101 = vector.load %arg4[%c0_37, %c0_38, %c2_39, %c0_40] : memref<1x6x18x18xf32, #tpu.memory_space<vmem>>, vector<1x6x16x16xf32>
    %c6 = arith.constant 6 : index
    %102 = memref.load %arg1[%c6] : memref<29xf32, #tpu.memory_space<smem>>
    %103 = vector.extract_strided_slice %101 {offsets = [0, 0, 0, 0], sizes = [1, 4, 16, 16], strides = [1, 1, 1, 1]} : vector<1x6x16x16xf32> to vector<1x4x16x16xf32>
    %104 = vector.broadcast %102 : f32 to vector<1x4x16x16xf32>
    %105 = arith.mulf %104, %103 : vector<1x4x16x16xf32>
    %106 = arith.addf %100, %105 : vector<1x4x16x16xf32>
    %c15 = arith.constant 15 : index
    %107 = memref.load %arg1[%c15] : memref<29xf32, #tpu.memory_space<smem>>
    %108 = vector.extract_strided_slice %101 {offsets = [0, 1, 0, 0], sizes = [1, 4, 16, 16], strides = [1, 1, 1, 1]} : vector<1x6x16x16xf32> to vector<1x4x16x16xf32>
    %109 = vector.broadcast %107 : f32 to vector<1x4x16x16xf32>
    %110 = arith.mulf %109, %108 : vector<1x4x16x16xf32>
    %111 = arith.addf %106, %110 : vector<1x4x16x16xf32>
    %c24 = arith.constant 24 : index
    %112 = memref.load %arg1[%c24] : memref<29xf32, #tpu.memory_space<smem>>
    %113 = vector.extract_strided_slice %101 {offsets = [0, 2, 0, 0], sizes = [1, 4, 16, 16], strides = [1, 1, 1, 1]} : vector<1x6x16x16xf32> to vector<1x4x16x16xf32>
    %114 = vector.broadcast %112 : f32 to vector<1x4x16x16xf32>
    %115 = arith.mulf %114, %113 : vector<1x4x16x16xf32>
    %116 = arith.addf %111, %115 : vector<1x4x16x16xf32>
    %c0_41 = arith.constant 0 : index
    %c0_42 = arith.constant 0 : index
    %c2_43 = arith.constant 2 : index
    %c1_44 = arith.constant 1 : index
    %117 = vector.load %arg4[%c0_41, %c0_42, %c2_43, %c1_44] : memref<1x6x18x18xf32, #tpu.memory_space<vmem>>, vector<1x6x16x16xf32>
    %c7 = arith.constant 7 : index
    %118 = memref.load %arg1[%c7] : memref<29xf32, #tpu.memory_space<smem>>
    %119 = vector.extract_strided_slice %117 {offsets = [0, 0, 0, 0], sizes = [1, 4, 16, 16], strides = [1, 1, 1, 1]} : vector<1x6x16x16xf32> to vector<1x4x16x16xf32>
    %120 = vector.broadcast %118 : f32 to vector<1x4x16x16xf32>
    %121 = arith.mulf %120, %119 : vector<1x4x16x16xf32>
    %122 = arith.addf %116, %121 : vector<1x4x16x16xf32>
    %c16 = arith.constant 16 : index
    %123 = memref.load %arg1[%c16] : memref<29xf32, #tpu.memory_space<smem>>
    %124 = vector.extract_strided_slice %117 {offsets = [0, 1, 0, 0], sizes = [1, 4, 16, 16], strides = [1, 1, 1, 1]} : vector<1x6x16x16xf32> to vector<1x4x16x16xf32>
    %125 = vector.broadcast %123 : f32 to vector<1x4x16x16xf32>
    %126 = arith.mulf %125, %124 : vector<1x4x16x16xf32>
    %127 = arith.addf %122, %126 : vector<1x4x16x16xf32>
    %c25 = arith.constant 25 : index
    %128 = memref.load %arg1[%c25] : memref<29xf32, #tpu.memory_space<smem>>
    %129 = vector.extract_strided_slice %117 {offsets = [0, 2, 0, 0], sizes = [1, 4, 16, 16], strides = [1, 1, 1, 1]} : vector<1x6x16x16xf32> to vector<1x4x16x16xf32>
    %130 = vector.broadcast %128 : f32 to vector<1x4x16x16xf32>
    %131 = arith.mulf %130, %129 : vector<1x4x16x16xf32>
    %132 = arith.addf %127, %131 : vector<1x4x16x16xf32>
    %c0_45 = arith.constant 0 : index
    %c0_46 = arith.constant 0 : index
    %c2_47 = arith.constant 2 : index
    %c2_48 = arith.constant 2 : index
    %133 = vector.load %arg4[%c0_45, %c0_46, %c2_47, %c2_48] : memref<1x6x18x18xf32, #tpu.memory_space<vmem>>, vector<1x6x16x16xf32>
    %c8 = arith.constant 8 : index
    %134 = memref.load %arg1[%c8] : memref<29xf32, #tpu.memory_space<smem>>
    %135 = vector.extract_strided_slice %133 {offsets = [0, 0, 0, 0], sizes = [1, 4, 16, 16], strides = [1, 1, 1, 1]} : vector<1x6x16x16xf32> to vector<1x4x16x16xf32>
    %136 = vector.broadcast %134 : f32 to vector<1x4x16x16xf32>
    %137 = arith.mulf %136, %135 : vector<1x4x16x16xf32>
    %138 = arith.addf %132, %137 : vector<1x4x16x16xf32>
    %c17 = arith.constant 17 : index
    %139 = memref.load %arg1[%c17] : memref<29xf32, #tpu.memory_space<smem>>
    %140 = vector.extract_strided_slice %133 {offsets = [0, 1, 0, 0], sizes = [1, 4, 16, 16], strides = [1, 1, 1, 1]} : vector<1x6x16x16xf32> to vector<1x4x16x16xf32>
    %141 = vector.broadcast %139 : f32 to vector<1x4x16x16xf32>
    %142 = arith.mulf %141, %140 : vector<1x4x16x16xf32>
    %143 = arith.addf %138, %142 : vector<1x4x16x16xf32>
    %c26 = arith.constant 26 : index
    %144 = memref.load %arg1[%c26] : memref<29xf32, #tpu.memory_space<smem>>
    %145 = vector.extract_strided_slice %133 {offsets = [0, 2, 0, 0], sizes = [1, 4, 16, 16], strides = [1, 1, 1, 1]} : vector<1x6x16x16xf32> to vector<1x4x16x16xf32>
    %146 = vector.broadcast %144 : f32 to vector<1x4x16x16xf32>
    %147 = arith.mulf %146, %145 : vector<1x4x16x16xf32>
    %148 = arith.addf %143, %147 : vector<1x4x16x16xf32>
    %c27 = arith.constant 27 : index
    %149 = memref.load %arg1[%c27] : memref<29xf32, #tpu.memory_space<smem>>
    %150 = vector.broadcast %149 : f32 to vector<1x4x16x16xf32>
    %151 = arith.addf %148, %150 : vector<1x4x16x16xf32>
    %c28 = arith.constant 28 : index
    %152 = memref.load %arg1[%c28] : memref<29xf32, #tpu.memory_space<smem>>
    %cst_49 = arith.constant 0.000000e+00 : f32
    %153 = vector.broadcast %cst_49 : f32 to vector<1x4x16x16xf32>
    %154 = arith.subf %153, %151 : vector<1x4x16x16xf32>
    %155 = math.exp %154 : vector<1x4x16x16xf32>
    %cst_50 = arith.constant 1.000000e+00 : f32
    %156 = vector.broadcast %cst_50 : f32 to vector<1x4x16x16xf32>
    %157 = arith.addf %156, %155 : vector<1x4x16x16xf32>
    %158 = tpu.reciprocal %157 : vector<1x4x16x16xf32> -> vector<1x4x16x16xf32>
    %159 = vector.broadcast %152 : f32 to vector<1x4x16x16xf32>
    %160 = arith.mulf %159, %158 : vector<1x4x16x16xf32>
    %161 = arith.mulf %0, %160 : vector<1x4x16x16xf32>
    %162 = arith.addf %161, %0 : vector<1x4x16x16xf32>
    %c0_51 = arith.constant 0 : index
    %c0_52 = arith.constant 0 : index
    %c0_53 = arith.constant 0 : index
    %c0_54 = arith.constant 0 : index
    %163 = vector.load %arg3[%c0_51, %c0_52, %c0_53, %c0_54] : memref<1x4x16x16xf32, #tpu.memory_space<vmem>>, vector<1x4x16x16xf32>
    tpu.vector_store %arg3[%c0_51, %c0_52, %c0_53, %c0_54], %162 {strides = array<i32>} : memref<1x4x16x16xf32, #tpu.memory_space<vmem>>, vector<1x4x16x16xf32>,
    return
  }
  func.func @transform_0(%arg0: i32) -> i32 {
    %c0_i32 = arith.constant 0 : i32
    %c0_i32_0 = arith.constant 0 : i32
    return %c0_i32 : i32
  }
  func.func @transform_1(%arg0: i32) -> (i32, i32, i32, i32) {
    %c0_i32 = arith.constant 0 : i32
    %c0_i32_0 = arith.constant 0 : i32
    %c0_i32_1 = arith.constant 0 : i32
    %c0_i32_2 = arith.constant 0 : i32
    return %arg0, %c0_i32, %c0_i32_0, %c0_i32_1 : i32, i32, i32, i32
  }
  func.func @transform_2(%arg0: i32) -> (i32, i32, i32, i32) {
    %c0_i32 = arith.constant 0 : i32
    %c0_i32_0 = arith.constant 0 : i32
    %c0_i32_1 = arith.constant 0 : i32
    %c0_i32_2 = arith.constant 0 : i32
    return %arg0, %c0_i32, %c0_i32_0, %c0_i32_1 : i32, i32, i32, i32
  }
}

</mosaic_0001>

<llo_original>
// kernel: tpu_custom_call.1
$region0: #{tpu_custom_call.1}
  #allocation0 [shape = 'u32[]', space=smem, size = 0x4, offset = 0x4, fixed_abs, tag = 'smem constant byte address 0x4 - core index']
  #allocation1 [shape = 'u32[72,128]{1,0:T(1,128)}', space=vmem, size = 0x9000, scoped, tag = 'internal scratch']
  #allocation2 [shape = 'f32[1,6,18,18]{3,2,1,0:T(8,128)}', space=vmem, size = 0x12000, scoped, tag = 'scratch operand']
  %s0 = inlined_call_operand.hbm [shape: f32[29], index: 0, kind: input, shape index: {}]
  %s1 = inlined_call_operand.hbm [shape: f32[2,4,16,16], index: 1, kind: input, shape index: {}]
  %s2 = inlined_call_operand.hbm [shape: f32[2,4,16,16], index: 2, kind: output, shape index: {}]
  %s3 = sld [smem:[#allocation0]]
  $region49: #{tpu_custom_call.1} parent=0
    _
  %s5 = ssub.s32 1, %s3
  %s6 = scalar_select 0, %s5, %s3
  $region1: #{tpu_custom_call.1} parent=0
    #allocation3 [shape = 'u8[512]{0}', space=smem, size = 0x200, scoped, tag = 'input window, operand 0, single buffered']
    #allocation4 [shape = 's32[2]{0}', space=sflag, size = 0x8, scoped, tag = 'scoped memory for tpu_custom_call.1']
    #allocation5 [shape = 's32[2]{0}', space=sflag, size = 0x8, scoped, tag = 'scoped memory for tpu_custom_call.1']
    #allocation6 [shape = 's32[2]{0}', space=sflag, size = 0x8, scoped, tag = 'scoped memory for tpu_custom_call.1']
    #allocation7 [shape = 'u8[65536]{0}', space=vmem, size = 0x10000, scoped, tag = 'input window, operand 1']
    #allocation8 [shape = 'u8[65536]{0}', space=vmem, size = 0x10000, scoped, tag = 'output window, operand 0']
    %7 = vsyncpa [#allocation6], 0
    %8 = vsyncpa [#allocation4], 0
    %s9 = scalar_lea.sflag [#allocation4], 1
    %10 = vsyncpa %s9, 0
    %11 = vsyncpa [#allocation5], 0
    %s12 = scalar_lea.sflag [#allocation5], 1
    %13 = vsyncpa %s12, 0
    loop: start=0, step=1, limit=4
    $region2: #{tpu_custom_call.1} parent=1 // loop_pre_header
      _
    $region3: #{tpu_custom_call.1} parent=1 // loop_header
      %s15 = sphi 0, %s19
      %p16 = scmp.ge.s32.totalorder %s15, 4
      %s23 = sphi 0, %s23
      %s25 = sphi 0, %s23
      %s26 = sphi 0, %s25
      %s40 = sphi 0, %s26
      %s46 = sphi 0, %s48
      %s49 = sphi 0, %s46
      %s50 = sphi 0, %s49
      %s66 = sphi 0, %s50
      %s72 = sphi 0, %s74
      %s75 = sphi 0, %s72
      %s76 = sphi 0, %s75
      %s92 = sphi 0, %s76
    $region4: #{tpu_custom_call.1} parent=1 // loop_header_branch
      %18 = sbr.rel (%p16) target = $region8
    $region5: #{tpu_custom_call.1} parent=1 // loop_body
      %s20 = ssub.s32 %s15, 1
      %s21 = ssub.s32 %s15, 2
      %s22 = sadd.s32 %s15, 1
      %s24 = sadd.s32 %s23, 1
      %p27 = scmp.eq.s32.totalorder %s15, 1
      %p28 = scmp.ne.s32.totalorder %s23, %s25
      %p29 = scmp.eq.s32.totalorder %s15, 0
      %p30 = por %p28, %p29
      %p31 = scmp.ne.s32.totalorder %s23, %s25
      %p32 = scmp.eq.s32.totalorder %s20, 1
      %p33 = por %p31, %p32
      %p34 = scmp.ne.s32.totalorder %s25, %s26
      %p35 = scmp.eq.s32.totalorder %s20, 0
      %p36 = por %p34, %p35
      %p37 = scmp.ne.s32.totalorder %s25, %s26
      %p38 = scmp.eq.s32.totalorder %s21, 1
      %p39 = por %p37, %p38
      %p41 = scmp.ne.s32.totalorder %s26, %s40
      %p42 = scmp.eq.s32.totalorder %s21, 0
      %p43 = por %p41, %p42
      %s44 = ssub.s32 %s15, %s22
      %p45 = scmp.eq.s32.totalorder %s44, 0
      %s47 = sadd.s32 %s46, 1
      %s48 = scalar_select %p45, %s46, %s47
      %p51 = pneg %p45
      %p52 = scmp.eq.s32.totalorder %s15, 1
      %p53 = por %p51, %p52
      %p54 = scmp.ne.s32.totalorder %s46, %s49
      %p55 = scmp.eq.s32.totalorder %s15, 0
      %p56 = por %p54, %p55
      %p57 = scmp.ne.s32.totalorder %s46, %s49
      %p58 = scmp.eq.s32.totalorder %s20, 1
      %p59 = por %p57, %p58
      %p60 = scmp.ne.s32.totalorder %s49, %s50
      %p61 = scmp.eq.s32.totalorder %s20, 0
      %p62 = por %p60, %p61
      %p63 = scmp.ne.s32.totalorder %s49, %s50
      %p64 = scmp.eq.s32.totalorder %s21, 1
      %p65 = por %p63, %p64
      %p67 = scmp.ne.s32.totalorder %s50, %s66
      %p68 = scmp.eq.s32.totalorder %s21, 0
      %p69 = por %p67, %p68
      %s70 = ssub.s32 %s15, %s22
      %p71 = scmp.eq.s32.totalorder %s70, 0
      %s73 = sadd.s32 %s72, 1
      %s74 = scalar_select %p71, %s72, %s73
      %p77 = pneg %p71
      %p78 = scmp.eq.s32.totalorder %s15, 1
      %p79 = por %p77, %p78
      %p80 = scmp.ne.s32.totalorder %s72, %s75
      %p81 = scmp.eq.s32.totalorder %s15, 0
      %p82 = por %p80, %p81
      %p83 = scmp.ne.s32.totalorder %s72, %s75
      %p84 = scmp.eq.s32.totalorder %s20, 1
      %p85 = por %p83, %p84
      %p86 = scmp.ne.s32.totalorder %s75, %s76
      %p87 = scmp.eq.s32.totalorder %s20, 0
      %p88 = por %p86, %p87
      %p89 = scmp.ne.s32.totalorder %s75, %s76
      %p90 = scmp.eq.s32.totalorder %s21, 1
      %p91 = por %p89, %p90
      %p93 = scmp.ne.s32.totalorder %s76, %s92
      %p94 = scmp.eq.s32.totalorder %s21, 0
      %p95 = por %p93, %p94
      %p96 = scmp.le.s32.totalorder 1, %s15
      %p97 = scmp.lt.s32.totalorder %s15, 3
      %p98 = pnand %p96, %p97
      %p99 = pneg %p98
      // Predicated region
      $region9: #{tpu_custom_call.1} parent=5 // pred_check
        _
      $region10: #{tpu_custom_call.1} parent=5 // pred_check_branch
        %101 = sbr.rel (%p98) target = $region12
      $region11: #{tpu_custom_call.1} parent=5 // pred_region
        %s102 = ssub.s32 %s15, 1
        // Predicated region
        $region13: #{tpu_custom_call.1} parent=11 // pred_check
          %p103 = pneg %p36
        $region14: #{tpu_custom_call.1} parent=11 // pred_check_branch
          %105 = sbr.rel (%p103) target = $region16
        $region15: #{tpu_custom_call.1} parent=11 // pred_region
          %107 = vsyncadd [#allocation6], 0
          %s109 = sshll.u32 %s0, 4
          %s110 = int_to_ptr.hbm [resolvable:$true] %s109
          %112 = dma.hbm_to_smem %s110, 16, [#allocation3], [#allocation6]
        $region16: #{tpu_custom_call.1} parent=11 // pred_fallthru
          _
      $region12: #{tpu_custom_call.1} parent=5 // pred_fallthru
        _
      %p113 = scmp.lt.s32.totalorder %s15, 2
      // Predicated region
      $region17: #{tpu_custom_call.1} parent=5 // pred_check
        %p114 = pneg %p113
      $region18: #{tpu_custom_call.1} parent=5 // pred_check_branch
        %116 = sbr.rel (%p114) target = $region20
      $region19: #{tpu_custom_call.1} parent=5 // pred_region
        // Predicated region
        $region21: #{tpu_custom_call.1} parent=19 // pred_check
          %p117 = pneg %p56
        $region22: #{tpu_custom_call.1} parent=19 // pred_check_branch
          %119 = sbr.rel (%p117) target = $region24
        $region23: #{tpu_custom_call.1} parent=19 // pred_region
          %s120 = sand.u32 %s46, 1
          %s121 = scalar_lea.sflag [#allocation4], %s120
          %s122 = sand.u32 %s46, 1
          %s123 = smul.addr %s122, 64
          %s124 = scalar_lea.vmem [#allocation7], %s123
          %126 = vsyncadd %s121, 0
          %s127 = smul.addr %s15, 8
          %s128 = smul.addr %s127, 8
          %s129 = scalar_lea.hbm %s1, %s128
          %s130 = sshll.u32 %s129, 4
          %s131 = int_to_ptr.hbm [resolvable:$true] %s130
          %s132 = sshll.u32 %s124, 4
          %s133 = int_to_ptr.vmem [resolvable:$true] %s132
          %138 = dma.hbm_to_vmem [thread:$0]  %s131, 1024, %s133, %s121, 128, 128, 8
        $region24: #{tpu_custom_call.1} parent=19 // pred_fallthru
          _
      $region20: #{tpu_custom_call.1} parent=5 // pred_fallthru
        _
      %p139 = scmp.le.s32.totalorder 1, %s15
      %p140 = scmp.lt.s32.totalorder %s15, 3
      %p141 = pnand %p139, %p140
      %p142 = pneg %p141
      // Predicated region
      $region25: #{tpu_custom_call.1} parent=5 // pred_check
        _
      $region26: #{tpu_custom_call.1} parent=5 // pred_check_branch
        %144 = sbr.rel (%p141) target = $region28
      $region27: #{tpu_custom_call.1} parent=5 // pred_region
        %s145 = ssub.s32 %s15, 1
        // Predicated region
        $region29: #{tpu_custom_call.1} parent=27 // pred_check
          %p146 = pneg %p36
        $region30: #{tpu_custom_call.1} parent=27 // pred_check_branch
          %148 = sbr.rel (%p146) target = $region32
        $region31: #{tpu_custom_call.1} parent=27 // pred_region
          %150 = dma.done [#allocation6], 16
        $region32: #{tpu_custom_call.1} parent=27 // pred_fallthru
          _
        %s151 = sand.u32 %s49, 1
        %s152 = scalar_lea.sflag [#allocation4], %s151
        %s153 = sand.u32 %s49, 1
        %s154 = smul.addr %s153, 64
        %s155 = scalar_lea.vmem [#allocation7], %s154
        // Predicated region
        $region33: #{tpu_custom_call.1} parent=27 // pred_check
          %p156 = pneg %p62
        $region34: #{tpu_custom_call.1} parent=27 // pred_check_branch
          %158 = sbr.rel (%p156) target = $region36
        $region35: #{tpu_custom_call.1} parent=27 // pred_region
          %160 = dma.done %s152, 1024
        $region36: #{tpu_custom_call.1} parent=27 // pred_fallthru
          _
        %161 = sfence
        %p162 = pneg %p36
        %p163 = pneg %p33
        %s164 = sand.u32 %s49, 1
        %s165 = scalar_lea.sflag [#allocation4], %s164
        %s166 = sand.u32 %s49, 1
        %s167 = smul.addr %s166, 64
        %s168 = scalar_lea.vmem [#allocation7], %s167
        %p169 = pneg %p62
        %p170 = pneg %p59
        %p171 = pneg %p88
        %p172 = pneg %p85
        %s173 = sand.u32 %s75, 1
        %s174 = scalar_lea.sflag [#allocation5], %s173
        %s175 = sand.u32 %s75, 1
        %s176 = smul.addr %s175, 64
        %s177 = scalar_lea.vmem [#allocation8], %s176
        %v178 = vld [vmem:[%s155] sm:$0xff]
        %v179 = vld [vmem:[%s155 + $0x8] sm:$0xff]
        %v180 = vld [vmem:[%s155 + $0x10] sm:$0xff]
        %v181 = vld [vmem:[%s155 + $0x18] sm:$0xff]
        %v182 = vld [vmem:[%s155 + $0x20] sm:$0xff]
        %v183 = vld [vmem:[%s155 + $0x28] sm:$0xff]
        %v184 = vld [vmem:[%s155 + $0x30] sm:$0xff]
        %v185 = vld [vmem:[%s155 + $0x38] sm:$0xff]
        %vm186 = vcmask 146432
        %187 = vst.msk [vmem:[#allocation2] sm:$0xff] %vm186, 0.0
        %188 = vst.msk [vmem:[#allocation2 + $0x8] sm:$0xff] %vm186, 0.0
        %vm189 = vcmask 140288
        %190 = vst.msk [vmem:[#allocation2 + $0x10] sm:$0x3] %vm189, 0.0
        %191 = vst.msk [vmem:[#allocation2 + $0x18] sm:$0xff] %vm186, 0.0
        %192 = vst.msk [vmem:[#allocation2 + $0x20] sm:$0xff] %vm186, 0.0
        %193 = vst.msk [vmem:[#allocation2 + $0x28] sm:$0x3] %vm189, 0.0
        %194 = vst.msk [vmem:[#allocation2 + $0x30] sm:$0xff] %vm186, 0.0
        %195 = vst.msk [vmem:[#allocation2 + $0x38] sm:$0xff] %vm186, 0.0
        %196 = vst.msk [vmem:[#allocation2 + $0x40] sm:$0x3] %vm189, 0.0
        %197 = vst.msk [vmem:[#allocation2 + $0x48] sm:$0xff] %vm186, 0.0
        %198 = vst.msk [vmem:[#allocation2 + $0x50] sm:$0xff] %vm186, 0.0
        %199 = vst.msk [vmem:[#allocation2 + $0x58] sm:$0x3] %vm189, 0.0
        %200 = vst.msk [vmem:[#allocation2 + $0x60] sm:$0xff] %vm186, 0.0
        %201 = vst.msk [vmem:[#allocation2 + $0x68] sm:$0xff] %vm186, 0.0
        %202 = vst.msk [vmem:[#allocation2 + $0x70] sm:$0x3] %vm189, 0.0
        %203 = vst.msk [vmem:[#allocation2 + $0x78] sm:$0xff] %vm186, 0.0
        %204 = vst.msk [vmem:[#allocation2 + $0x80] sm:$0xff] %vm186, 0.0
        %205 = vst.msk [vmem:[#allocation2 + $0x88] sm:$0x3] %vm189, 0.0
        %214 = vrot.lane.b32.xlu0 %v178, 1
        %v215 = vpop.permute.xlu0 %214
        %216 = vrot.lane.b32.xlu0 %v179, 1
        %v217 = vpop.permute.xlu0 %216
        %218 = vrot.lane.b32.xlu0 %v180, 1
        %v219 = vpop.permute.xlu0 %218
        %220 = vrot.lane.b32.xlu0 %v181, 1
        %v221 = vpop.permute.xlu0 %220
        %222 = vrot.lane.b32.xlu0 %v182, 1
        %v223 = vpop.permute.xlu0 %222
        %224 = vrot.lane.b32.xlu0 %v183, 1
        %v225 = vpop.permute.xlu0 %224
        %226 = vrot.lane.b32.xlu0 %v184, 1
        %v227 = vpop.permute.xlu0 %226
        %228 = vrot.lane.b32.xlu0 %v185, 1
        %v229 = vpop.permute.xlu0 %228
        %s238 = scalar_lea.vmem [#allocation2], 24
        %vm239 = vcmask 138248
        %240 = vst.msk [vmem:[%s238 + $0x1] sm:$0xff] %vm239, %v215
        %241 = vst.msk [vmem:[%s238 + $0x9] sm:$0xff] %vm239, %v217
        %242 = vst.msk [vmem:[%s238 + $0x19] sm:$0xff] %vm239, %v219
        %243 = vst.msk [vmem:[%s238 + $0x21] sm:$0xff] %vm239, %v221
        %244 = vst.msk [vmem:[%s238 + $0x31] sm:$0xff] %vm239, %v223
        %245 = vst.msk [vmem:[%s238 + $0x39] sm:$0xff] %vm239, %v225
        %246 = vst.msk [vmem:[%s238 + $0x49] sm:$0xff] %vm239, %v227
        %247 = vst.msk [vmem:[%s238 + $0x51] sm:$0xff] %vm239, %v229
        %v248 = vld [vmem:[#allocation2] sm:$0xff]
        %v249 = vld [vmem:[#allocation2 + $0x8] sm:$0xff]
        %v250 = vld [vmem:[#allocation2 + $0x18] sm:$0xff]
        %v251 = vld [vmem:[#allocation2 + $0x20] sm:$0xff]
        %v252 = vld [vmem:[#allocation2 + $0x30] sm:$0xff]
        %v253 = vld [vmem:[#allocation2 + $0x38] sm:$0xff]
        %v254 = vld [vmem:[#allocation2 + $0x48] sm:$0xff]
        %v255 = vld [vmem:[#allocation2 + $0x50] sm:$0xff]
        %v256 = vld [vmem:[#allocation2 + $0x60] sm:$0xff]
        %v257 = vld [vmem:[#allocation2 + $0x68] sm:$0xff]
        %v258 = vld [vmem:[#allocation2 + $0x78] sm:$0xff]
        %v259 = vld [vmem:[#allocation2 + $0x80] sm:$0xff]
        %s260 = sld [smem:[#allocation3]]
        %v261 = vstv %s260
        %v262 = vmul.f32 %v261, %v248
        %v263 = vmul.f32 %v261, %v249
        %v264 = vmul.f32 %v261, %v250
        %v265 = vmul.f32 %v261, %v251
        %v266 = vmul.f32 %v261, %v252
        %v267 = vmul.f32 %v261, %v253
        %v268 = vmul.f32 %v261, %v254
        %v269 = vmul.f32 %v261, %v255
        %v270 = vadd.f32 %v262, 0.0
        %v271 = vadd.f32 %v263, 0.0
        %v272 = vadd.f32 %v264, 0.0
        %v273 = vadd.f32 %v265, 0.0
        %v274 = vadd.f32 %v266, 0.0
        %v275 = vadd.f32 %v267, 0.0
        %v276 = vadd.f32 %v268, 0.0
        %v277 = vadd.f32 %v269, 0.0
        %s278 = sld [smem:[#allocation3 + $0x9]]
        %v279 = vstv %s278
        %v280 = vmul.f32 %v279, %v250
        %v281 = vmul.f32 %v279, %v251
        %v282 = vmul.f32 %v279, %v252
        %v283 = vmul.f32 %v279, %v253
        %v284 = vmul.f32 %v279, %v254
        %v285 = vmul.f32 %v279, %v255
        %v286 = vmul.f32 %v279, %v256
        %v287 = vmul.f32 %v279, %v257
        %v288 = vadd.f32 %v270, %v280
        %v289 = vadd.f32 %v271, %v281
        %v290 = vadd.f32 %v272, %v282
        %v291 = vadd.f32 %v273, %v283
        %v292 = vadd.f32 %v274, %v284
        %v293 = vadd.f32 %v275, %v285
        %v294 = vadd.f32 %v276, %v286
        %v295 = vadd.f32 %v277, %v287
        %s296 = sld [smem:[#allocation3 + $0x12]]
        %v297 = vstv %s296
        %v298 = vmul.f32 %v297, %v252
        %v299 = vmul.f32 %v297, %v253
        %v300 = vmul.f32 %v297, %v254
        %v301 = vmul.f32 %v297, %v255
        %v302 = vmul.f32 %v297, %v256
        %v303 = vmul.f32 %v297, %v257
        %v304 = vmul.f32 %v297, %v258
        %v305 = vmul.f32 %v297, %v259
        %v306 = vadd.f32 %v288, %v298
        %v307 = vadd.f32 %v289, %v299
        %v308 = vadd.f32 %v290, %v300
        %v309 = vadd.f32 %v291, %v301
        %v310 = vadd.f32 %v292, %v302
        %v311 = vadd.f32 %v293, %v303
        %v312 = vadd.f32 %v294, %v304
        %v313 = vadd.f32 %v295, %v305
        %s314 = sld [smem:[#allocation3 + $0x1]]
        %v315 = vstv %s314
        %v316 = vmul.f32 %v315, %v248
        %v317 = vmul.f32 %v315, %v249
        %v318 = vmul.f32 %v315, %v250
        %v319 = vmul.f32 %v315, %v251
        %v320 = vmul.f32 %v315, %v252
        %v321 = vmul.f32 %v315, %v253
        %v322 = vmul.f32 %v315, %v254
        %v323 = vmul.f32 %v315, %v255
        %332 = vrot.lane.b32.xlu0 %v316, 127
        %v333 = vpop.permute.xlu0 %332
        %334 = vrot.lane.b32.xlu0 %v317, 127
        %v335 = vpop.permute.xlu0 %334
        %336 = vrot.lane.b32.xlu0 %v318, 127
        %v337 = vpop.permute.xlu0 %336
        %338 = vrot.lane.b32.xlu0 %v319, 127
        %v339 = vpop.permute.xlu0 %338
        %340 = vrot.lane.b32.xlu0 %v320, 127
        %v341 = vpop.permute.xlu0 %340
        %342 = vrot.lane.b32.xlu0 %v321, 127
        %v343 = vpop.permute.xlu0 %342
        %344 = vrot.lane.b32.xlu0 %v322, 127
        %v345 = vpop.permute.xlu0 %344
        %346 = vrot.lane.b32.xlu0 %v323, 127
        %v347 = vpop.permute.xlu0 %346
        %v356 = vadd.f32 %v306, %v333
        %v357 = vadd.f32 %v307, %v335
        %v358 = vadd.f32 %v308, %v337
        %v359 = vadd.f32 %v309, %v339
        %v360 = vadd.f32 %v310, %v341
        %v361 = vadd.f32 %v311, %v343
        %v362 = vadd.f32 %v312, %v345
        %v363 = vadd.f32 %v313, %v347
        %s364 = sld [smem:[#allocation3 + $0xa]]
        %v365 = vstv %s364
        %v366 = vmul.f32 %v365, %v250
        %v367 = vmul.f32 %v365, %v251
        %v368 = vmul.f32 %v365, %v252
        %v369 = vmul.f32 %v365, %v253
        %v370 = vmul.f32 %v365, %v254
        %v371 = vmul.f32 %v365, %v255
        %v372 = vmul.f32 %v365, %v256
        %v373 = vmul.f32 %v365, %v257
        %382 = vrot.lane.b32.xlu0 %v366, 127
        %v383 = vpop.permute.xlu0 %382
        %384 = vrot.lane.b32.xlu0 %v367, 127
        %v385 = vpop.permute.xlu0 %384
        %386 = vrot.lane.b32.xlu0 %v368, 127
        %v387 = vpop.permute.xlu0 %386
        %388 = vrot.lane.b32.xlu0 %v369, 127
        %v389 = vpop.permute.xlu0 %388
        %390 = vrot.lane.b32.xlu0 %v370, 127
        %v391 = vpop.permute.xlu0 %390
        %392 = vrot.lane.b32.xlu0 %v371, 127
        %v393 = vpop.permute.xlu0 %392
        %394 = vrot.lane.b32.xlu0 %v372, 127
        %v395 = vpop.permute.xlu0 %394
        %396 = vrot.lane.b32.xlu0 %v373, 127
        %v397 = vpop.permute.xlu0 %396
        %v406 = vadd.f32 %v356, %v383
        %v407 = vadd.f32 %v357, %v385
        %v408 = vadd.f32 %v358, %v387
        %v409 = vadd.f32 %v359, %v389
        %v410 = vadd.f32 %v360, %v391
        %v411 = vadd.f32 %v361, %v393
        %v412 = vadd.f32 %v362, %v395
        %v413 = vadd.f32 %v363, %v397
        %s414 = sld [smem:[#allocation3 + $0x13]]
        %v415 = vstv %s414
        %v416 = vmul.f32 %v415, %v252
        %v417 = vmul.f32 %v415, %v253
        %v418 = vmul.f32 %v415, %v254
        %v419 = vmul.f32 %v415, %v255
        %v420 = vmul.f32 %v415, %v256
        %v421 = vmul.f32 %v415, %v257
        %v422 = vmul.f32 %v415, %v258
        %v423 = vmul.f32 %v415, %v259
        %432 = vrot.lane.b32.xlu0 %v416, 127
        %v433 = vpop.permute.xlu0 %432
        %434 = vrot.lane.b32.xlu0 %v417, 127
        %v435 = vpop.permute.xlu0 %434
        %436 = vrot.lane.b32.xlu0 %v418, 127
        %v437 = vpop.permute.xlu0 %436
        %438 = vrot.lane.b32.xlu0 %v419, 127
        %v439 = vpop.permute.xlu0 %438
        %440 = vrot.lane.b32.xlu0 %v420, 127
        %v441 = vpop.permute.xlu0 %440
        %442 = vrot.lane.b32.xlu0 %v421, 127
        %v443 = vpop.permute.xlu0 %442
        %444 = vrot.lane.b32.xlu0 %v422, 127
        %v445 = vpop.permute.xlu0 %444
        %446 = vrot.lane.b32.xlu0 %v423, 127
        %v447 = vpop.permute.xlu0 %446
        %v456 = vadd.f32 %v406, %v433
        %v457 = vadd.f32 %v407, %v435
        %v458 = vadd.f32 %v408, %v437
        %v459 = vadd.f32 %v409, %v439
        %v460 = vadd.f32 %v410, %v441
        %v461 = vadd.f32 %v411, %v443
        %v462 = vadd.f32 %v412, %v445
        %v463 = vadd.f32 %v413, %v447
        %s464 = sld [smem:[#allocation3 + $0x2]]
        %v465 = vstv %s464
        %v466 = vmul.f32 %v465, %v248
        %v467 = vmul.f32 %v465, %v249
        %v468 = vmul.f32 %v465, %v250
        %v469 = vmul.f32 %v465, %v251
        %v470 = vmul.f32 %v465, %v252
        %v471 = vmul.f32 %v465, %v253
        %v472 = vmul.f32 %v465, %v254
        %v473 = vmul.f32 %v465, %v255
        %482 = vrot.lane.b32.xlu0 %v466, 126
        %v483 = vpop.permute.xlu0 %482
        %484 = vrot.lane.b32.xlu0 %v467, 126
        %v485 = vpop.permute.xlu0 %484
        %486 = vrot.lane.b32.xlu0 %v468, 126
        %v487 = vpop.permute.xlu0 %486
        %488 = vrot.lane.b32.xlu0 %v469, 126
        %v489 = vpop.permute.xlu0 %488
        %490 = vrot.lane.b32.xlu0 %v470, 126
        %v491 = vpop.permute.xlu0 %490
        %492 = vrot.lane.b32.xlu0 %v471, 126
        %v493 = vpop.permute.xlu0 %492
        %494 = vrot.lane.b32.xlu0 %v472, 126
        %v495 = vpop.permute.xlu0 %494
        %496 = vrot.lane.b32.xlu0 %v473, 126
        %v497 = vpop.permute.xlu0 %496
        %v506 = vadd.f32 %v456, %v483
        %v507 = vadd.f32 %v457, %v485
        %v508 = vadd.f32 %v458, %v487
        %v509 = vadd.f32 %v459, %v489
        %v510 = vadd.f32 %v460, %v491
        %v511 = vadd.f32 %v461, %v493
        %v512 = vadd.f32 %v462, %v495
        %v513 = vadd.f32 %v463, %v497
        %s514 = sld [smem:[#allocation3 + $0xb]]
        %v515 = vstv %s514
        %v516 = vmul.f32 %v515, %v250
        %v517 = vmul.f32 %v515, %v251
        %v518 = vmul.f32 %v515, %v252
        %v519 = vmul.f32 %v515, %v253
        %v520 = vmul.f32 %v515, %v254
        %v521 = vmul.f32 %v515, %v255
        %v522 = vmul.f32 %v515, %v256
        %v523 = vmul.f32 %v515, %v257
        %532 = vrot.lane.b32.xlu0 %v516, 126
        %v533 = vpop.permute.xlu0 %532
        %534 = vrot.lane.b32.xlu0 %v517, 126
        %v535 = vpop.permute.xlu0 %534
        %536 = vrot.lane.b32.xlu0 %v518, 126
        %v537 = vpop.permute.xlu0 %536
        %538 = vrot.lane.b32.xlu0 %v519, 126
        %v539 = vpop.permute.xlu0 %538
        %540 = vrot.lane.b32.xlu0 %v520, 126
        %v541 = vpop.permute.xlu0 %540
        %542 = vrot.lane.b32.xlu0 %v521, 126
        %v543 = vpop.permute.xlu0 %542
        %544 = vrot.lane.b32.xlu0 %v522, 126
        %v545 = vpop.permute.xlu0 %544
        %546 = vrot.lane.b32.xlu0 %v523, 126
        %v547 = vpop.permute.xlu0 %546
        %v556 = vadd.f32 %v506, %v533
        %v557 = vadd.f32 %v507, %v535
        %v558 = vadd.f32 %v508, %v537
        %v559 = vadd.f32 %v509, %v539
        %v560 = vadd.f32 %v510, %v541
        %v561 = vadd.f32 %v511, %v543
        %v562 = vadd.f32 %v512, %v545
        %v563 = vadd.f32 %v513, %v547
        %s564 = sld [smem:[#allocation3 + $0x14]]
        %v565 = vstv %s564
        %v566 = vmul.f32 %v565, %v252
        %v567 = vmul.f32 %v565, %v253
        %v568 = vmul.f32 %v565, %v254
        %v569 = vmul.f32 %v565, %v255
        %v570 = vmul.f32 %v565, %v256
        %v571 = vmul.f32 %v565, %v257
        %v572 = vmul.f32 %v565, %v258
        %v573 = vmul.f32 %v565, %v259
        %582 = vrot.lane.b32.xlu0 %v566, 126
        %v583 = vpop.permute.xlu0 %582
        %584 = vrot.lane.b32.xlu0 %v567, 126
        %v585 = vpop.permute.xlu0 %584
        %586 = vrot.lane.b32.xlu0 %v568, 126
        %v587 = vpop.permute.xlu0 %586
        %588 = vrot.lane.b32.xlu0 %v569, 126
        %v589 = vpop.permute.xlu0 %588
        %590 = vrot.lane.b32.xlu0 %v570, 126
        %v591 = vpop.permute.xlu0 %590
        %592 = vrot.lane.b32.xlu0 %v571, 126
        %v593 = vpop.permute.xlu0 %592
        %594 = vrot.lane.b32.xlu0 %v572, 126
        %v595 = vpop.permute.xlu0 %594
        %596 = vrot.lane.b32.xlu0 %v573, 126
        %v597 = vpop.permute.xlu0 %596
        %v606 = vadd.f32 %v556, %v583
        %v607 = vadd.f32 %v557, %v585
        %v608 = vadd.f32 %v558, %v587
        %v609 = vadd.f32 %v559, %v589
        %v610 = vadd.f32 %v560, %v591
        %v611 = vadd.f32 %v561, %v593
        %v612 = vadd.f32 %v562, %v595
        %v613 = vadd.f32 %v563, %v597
        %v614 = vld [vmem:[#allocation2 + $0x1] sm:$0xff]
        %v615 = vld [vmem:[#allocation2 + $0x9] sm:$0xff]
        %v616 = vld [vmem:[#allocation2 + $0x19] sm:$0xff]
        %v617 = vld [vmem:[#allocation2 + $0x21] sm:$0xff]
        %v618 = vld [vmem:[#allocation2 + $0x31] sm:$0xff]
        %v619 = vld [vmem:[#allocation2 + $0x39] sm:$0xff]
        %v620 = vld [vmem:[#allocation2 + $0x49] sm:$0xff]
        %v621 = vld [vmem:[#allocation2 + $0x51] sm:$0xff]
        %v622 = vld [vmem:[#allocation2 + $0x61] sm:$0xff]
        %v623 = vld [vmem:[#allocation2 + $0x69] sm:$0xff]
        %v624 = vld [vmem:[#allocation2 + $0x79] sm:$0xff]
        %v625 = vld [vmem:[#allocation2 + $0x81] sm:$0xff]
        %s626 = sld [smem:[#allocation3 + $0x3]]
        %v627 = vstv %s626
        %v628 = vmul.f32 %v627, %v614
        %v629 = vmul.f32 %v627, %v615
        %v630 = vmul.f32 %v627, %v616
        %v631 = vmul.f32 %v627, %v617
        %v632 = vmul.f32 %v627, %v618
        %v633 = vmul.f32 %v627, %v619
        %v634 = vmul.f32 %v627, %v620
        %v635 = vmul.f32 %v627, %v621
        %v636 = vadd.f32 %v606, %v628
        %v637 = vadd.f32 %v607, %v629
        %v638 = vadd.f32 %v608, %v630
        %v639 = vadd.f32 %v609, %v631
        %v640 = vadd.f32 %v610, %v632
        %v641 = vadd.f32 %v611, %v633
        %v642 = vadd.f32 %v612, %v634
        %v643 = vadd.f32 %v613, %v635
        %s644 = sld [smem:[#allocation3 + $0xc]]
        %v645 = vstv %s644
        %v646 = vmul.f32 %v645, %v616
        %v647 = vmul.f32 %v645, %v617
        %v648 = vmul.f32 %v645, %v618
        %v649 = vmul.f32 %v645, %v619
        %v650 = vmul.f32 %v645, %v620
        %v651 = vmul.f32 %v645, %v621
        %v652 = vmul.f32 %v645, %v622
        %v653 = vmul.f32 %v645, %v623
        %v654 = vadd.f32 %v636, %v646
        %v655 = vadd.f32 %v637, %v647
        %v656 = vadd.f32 %v638, %v648
        %v657 = vadd.f32 %v639, %v649
        %v658 = vadd.f32 %v640, %v650
        %v659 = vadd.f32 %v641, %v651
        %v660 = vadd.f32 %v642, %v652
        %v661 = vadd.f32 %v643, %v653
        %s662 = sld [smem:[#allocation3 + $0x15]]
        %v663 = vstv %s662
        %v664 = vmul.f32 %v663, %v618
        %v665 = vmul.f32 %v663, %v619
        %v666 = vmul.f32 %v663, %v620
        %v667 = vmul.f32 %v663, %v621
        %v668 = vmul.f32 %v663, %v622
        %v669 = vmul.f32 %v663, %v623
        %v670 = vmul.f32 %v663, %v624
        %v671 = vmul.f32 %v663, %v625
        %v672 = vadd.f32 %v654, %v664
        %v673 = vadd.f32 %v655, %v665
        %v674 = vadd.f32 %v656, %v666
        %v675 = vadd.f32 %v657, %v667
        %v676 = vadd.f32 %v658, %v668
        %v677 = vadd.f32 %v659, %v669
        %v678 = vadd.f32 %v660, %v670
        %v679 = vadd.f32 %v661, %v671
        %s680 = sld [smem:[#allocation3 + $0x4]]
        %v681 = vstv %s680
        %v682 = vmul.f32 %v681, %v614
        %v683 = vmul.f32 %v681, %v615
        %v684 = vmul.f32 %v681, %v616
        %v685 = vmul.f32 %v681, %v617
        %v686 = vmul.f32 %v681, %v618
        %v687 = vmul.f32 %v681, %v619
        %v688 = vmul.f32 %v681, %v620
        %v689 = vmul.f32 %v681, %v621
        %698 = vrot.lane.b32.xlu0 %v682, 127
        %v699 = vpop.permute.xlu0 %698
        %700 = vrot.lane.b32.xlu0 %v683, 127
        %v701 = vpop.permute.xlu0 %700
        %702 = vrot.lane.b32.xlu0 %v684, 127
        %v703 = vpop.permute.xlu0 %702
        %704 = vrot.lane.b32.xlu0 %v685, 127
        %v705 = vpop.permute.xlu0 %704
        %706 = vrot.lane.b32.xlu0 %v686, 127
        %v707 = vpop.permute.xlu0 %706
        %708 = vrot.lane.b32.xlu0 %v687, 127
        %v709 = vpop.permute.xlu0 %708
        %710 = vrot.lane.b32.xlu0 %v688, 127
        %v711 = vpop.permute.xlu0 %710
        %712 = vrot.lane.b32.xlu0 %v689, 127
        %v713 = vpop.permute.xlu0 %712
        %v722 = vadd.f32 %v672, %v699
        %v723 = vadd.f32 %v673, %v701
        %v724 = vadd.f32 %v674, %v703
        %v725 = vadd.f32 %v675, %v705
        %v726 = vadd.f32 %v676, %v707
        %v727 = vadd.f32 %v677, %v709
        %v728 = vadd.f32 %v678, %v711
        %v729 = vadd.f32 %v679, %v713
        %s730 = sld [smem:[#allocation3 + $0xd]]
        %v731 = vstv %s730
        %v732 = vmul.f32 %v731, %v616
        %v733 = vmul.f32 %v731, %v617
        %v734 = vmul.f32 %v731, %v618
        %v735 = vmul.f32 %v731, %v619
        %v736 = vmul.f32 %v731, %v620
        %v737 = vmul.f32 %v731, %v621
        %v738 = vmul.f32 %v731, %v622
        %v739 = vmul.f32 %v731, %v623
        %748 = vrot.lane.b32.xlu0 %v732, 127
        %v749 = vpop.permute.xlu0 %748
        %750 = vrot.lane.b32.xlu0 %v733, 127
        %v751 = vpop.permute.xlu0 %750
        %752 = vrot.lane.b32.xlu0 %v734, 127
        %v753 = vpop.permute.xlu0 %752
        %754 = vrot.lane.b32.xlu0 %v735, 127
        %v755 = vpop.permute.xlu0 %754
        %756 = vrot.lane.b32.xlu0 %v736, 127
        %v757 = vpop.permute.xlu0 %756
        %758 = vrot.lane.b32.xlu0 %v737, 127
        %v759 = vpop.permute.xlu0 %758
        %760 = vrot.lane.b32.xlu0 %v738, 127
        %v761 = vpop.permute.xlu0 %760
        %762 = vrot.lane.b32.xlu0 %v739, 127
        %v763 = vpop.permute.xlu0 %762
        %v772 = vadd.f32 %v722, %v749
        %v773 = vadd.f32 %v723, %v751
        %v774 = vadd.f32 %v724, %v753
        %v775 = vadd.f32 %v725, %v755
        %v776 = vadd.f32 %v726, %v757
        %v777 = vadd.f32 %v727, %v759
        %v778 = vadd.f32 %v728, %v761
        %v779 = vadd.f32 %v729, %v763
        %s780 = sld [smem:[#allocation3 + $0x16]]
        %v781 = vstv %s780
        %v782 = vmul.f32 %v781, %v618
        %v783 = vmul.f32 %v781, %v619
        %v784 = vmul.f32 %v781, %v620
        %v785 = vmul.f32 %v781, %v621
        %v786 = vmul.f32 %v781, %v622
        %v787 = vmul.f32 %v781, %v623
        %v788 = vmul.f32 %v781, %v624
        %v789 = vmul.f32 %v781, %v625
        %798 = vrot.lane.b32.xlu0 %v782, 127
        %v799 = vpop.permute.xlu0 %798
        %800 = vrot.lane.b32.xlu0 %v783, 127
        %v801 = vpop.permute.xlu0 %800
        %802 = vrot.lane.b32.xlu0 %v784, 127
        %v803 = vpop.permute.xlu0 %802
        %804 = vrot.lane.b32.xlu0 %v785, 127
        %v805 = vpop.permute.xlu0 %804
        %806 = vrot.lane.b32.xlu0 %v786, 127
        %v807 = vpop.permute.xlu0 %806
        %808 = vrot.lane.b32.xlu0 %v787, 127
        %v809 = vpop.permute.xlu0 %808
        %810 = vrot.lane.b32.xlu0 %v788, 127
        %v811 = vpop.permute.xlu0 %810
        %812 = vrot.lane.b32.xlu0 %v789, 127
        %v813 = vpop.permute.xlu0 %812
        %v822 = vadd.f32 %v772, %v799
        %v823 = vadd.f32 %v773, %v801
        %v824 = vadd.f32 %v774, %v803
        %v825 = vadd.f32 %v775, %v805
        %v826 = vadd.f32 %v776, %v807
        %v827 = vadd.f32 %v777, %v809
        %v828 = vadd.f32 %v778, %v811
        %v829 = vadd.f32 %v779, %v813
        %s830 = sld [smem:[#allocation3 + $0x5]]
        %v831 = vstv %s830
        %v832 = vmul.f32 %v831, %v614
        %v833 = vmul.f32 %v831, %v615
        %v834 = vmul.f32 %v831, %v616
        %v835 = vmul.f32 %v831, %v617
        %v836 = vmul.f32 %v831, %v618
        %v837 = vmul.f32 %v831, %v619
        %v838 = vmul.f32 %v831, %v620
        %v839 = vmul.f32 %v831, %v621
        %848 = vrot.lane.b32.xlu0 %v832, 126
        %v849 = vpop.permute.xlu0 %848
        %850 = vrot.lane.b32.xlu0 %v833, 126
        %v851 = vpop.permute.xlu0 %850
        %852 = vrot.lane.b32.xlu0 %v834, 126
        %v853 = vpop.permute.xlu0 %852
        %854 = vrot.lane.b32.xlu0 %v835, 126
        %v855 = vpop.permute.xlu0 %854
        %856 = vrot.lane.b32.xlu0 %v836, 126
        %v857 = vpop.permute.xlu0 %856
        %858 = vrot.lane.b32.xlu0 %v837, 126
        %v859 = vpop.permute.xlu0 %858
        %860 = vrot.lane.b32.xlu0 %v838, 126
        %v861 = vpop.permute.xlu0 %860
        %862 = vrot.lane.b32.xlu0 %v839, 126
        %v863 = vpop.permute.xlu0 %862
        %v872 = vadd.f32 %v822, %v849
        %v873 = vadd.f32 %v823, %v851
        %v874 = vadd.f32 %v824, %v853
        %v875 = vadd.f32 %v825, %v855
        %v876 = vadd.f32 %v826, %v857
        %v877 = vadd.f32 %v827, %v859
        %v878 = vadd.f32 %v828, %v861
        %v879 = vadd.f32 %v829, %v863
        %s880 = sld [smem:[#allocation3 + $0xe]]
        %v881 = vstv %s880
        %v882 = vmul.f32 %v881, %v616
        %v883 = vmul.f32 %v881, %v617
        %v884 = vmul.f32 %v881, %v618
        %v885 = vmul.f32 %v881, %v619
        %v886 = vmul.f32 %v881, %v620
        %v887 = vmul.f32 %v881, %v621
        %v888 = vmul.f32 %v881, %v622
        %v889 = vmul.f32 %v881, %v623
        %898 = vrot.lane.b32.xlu0 %v882, 126
        %v899 = vpop.permute.xlu0 %898
        %900 = vrot.lane.b32.xlu0 %v883, 126
        %v901 = vpop.permute.xlu0 %900
        %902 = vrot.lane.b32.xlu0 %v884, 126
        %v903 = vpop.permute.xlu0 %902
        %904 = vrot.lane.b32.xlu0 %v885, 126
        %v905 = vpop.permute.xlu0 %904
        %906 = vrot.lane.b32.xlu0 %v886, 126
        %v907 = vpop.permute.xlu0 %906
        %908 = vrot.lane.b32.xlu0 %v887, 126
        %v909 = vpop.permute.xlu0 %908
        %910 = vrot.lane.b32.xlu0 %v888, 126
        %v911 = vpop.permute.xlu0 %910
        %912 = vrot.lane.b32.xlu0 %v889, 126
        %v913 = vpop.permute.xlu0 %912
        %v922 = vadd.f32 %v872, %v899
        %v923 = vadd.f32 %v873, %v901
        %v924 = vadd.f32 %v874, %v903
        %v925 = vadd.f32 %v875, %v905
        %v926 = vadd.f32 %v876, %v907
        %v927 = vadd.f32 %v877, %v909
        %v928 = vadd.f32 %v878, %v911
        %v929 = vadd.f32 %v879, %v913
        %s930 = sld [smem:[#allocation3 + $0x17]]
        %v931 = vstv %s930
        %v932 = vmul.f32 %v931, %v618
        %v933 = vmul.f32 %v931, %v619
        %v934 = vmul.f32 %v931, %v620
        %v935 = vmul.f32 %v931, %v621
        %v936 = vmul.f32 %v931, %v622
        %v937 = vmul.f32 %v931, %v623
        %v938 = vmul.f32 %v931, %v624
        %v939 = vmul.f32 %v931, %v625
        %948 = vrot.lane.b32.xlu0 %v932, 126
        %v949 = vpop.permute.xlu0 %948
        %950 = vrot.lane.b32.xlu0 %v933, 126
        %v951 = vpop.permute.xlu0 %950
        %952 = vrot.lane.b32.xlu0 %v934, 126
        %v953 = vpop.permute.xlu0 %952
        %954 = vrot.lane.b32.xlu0 %v935, 126
        %v955 = vpop.permute.xlu0 %954
        %956 = vrot.lane.b32.xlu0 %v936, 126
        %v957 = vpop.permute.xlu0 %956
        %958 = vrot.lane.b32.xlu0 %v937, 126
        %v959 = vpop.permute.xlu0 %958
        %960 = vrot.lane.b32.xlu0 %v938, 126
        %v961 = vpop.permute.xlu0 %960
        %962 = vrot.lane.b32.xlu0 %v939, 126
        %v963 = vpop.permute.xlu0 %962
        %v972 = vadd.f32 %v922, %v949
        %v973 = vadd.f32 %v923, %v951
        %v974 = vadd.f32 %v924, %v953
        %v975 = vadd.f32 %v925, %v955
        %v976 = vadd.f32 %v926, %v957
        %v977 = vadd.f32 %v927, %v959
        %v978 = vadd.f32 %v928, %v961
        %v979 = vadd.f32 %v929, %v963
        %v980 = vld [vmem:[#allocation2 + $0x2] sm:$0xff]
        %v981 = vld [vmem:[#allocation2 + $0xa] sm:$0xff]
        %v982 = vld [vmem:[#allocation2 + $0x1a] sm:$0xff]
        %v983 = vld [vmem:[#allocation2 + $0x22] sm:$0xff]
        %v984 = vld [vmem:[#allocation2 + $0x32] sm:$0xff]
        %v985 = vld [vmem:[#allocation2 + $0x3a] sm:$0xff]
        %v986 = vld [vmem:[#allocation2 + $0x4a] sm:$0xff]
        %v987 = vld [vmem:[#allocation2 + $0x52] sm:$0xff]
        %v988 = vld [vmem:[#allocation2 + $0x62] sm:$0xff]
        %v989 = vld [vmem:[#allocation2 + $0x6a] sm:$0xff]
        %v990 = vld [vmem:[#allocation2 + $0x7a] sm:$0xff]
        %v991 = vld [vmem:[#allocation2 + $0x82] sm:$0xff]
        %s992 = sld [smem:[#allocation3 + $0x6]]
        %v993 = vstv %s992
        %v994 = vmul.f32 %v993, %v980
        %v995 = vmul.f32 %v993, %v981
        %v996 = vmul.f32 %v993, %v982
        %v997 = vmul.f32 %v993, %v983
        %v998 = vmul.f32 %v993, %v984
        %v999 = vmul.f32 %v993, %v985
        %v1000 = vmul.f32 %v993, %v986
        %v1001 = vmul.f32 %v993, %v987
        %v1002 = vadd.f32 %v972, %v994
        %v1003 = vadd.f32 %v973, %v995
        %v1004 = vadd.f32 %v974, %v996
        %v1005 = vadd.f32 %v975, %v997
        %v1006 = vadd.f32 %v976, %v998
        %v1007 = vadd.f32 %v977, %v999
        %v1008 = vadd.f32 %v978, %v1000
        %v1009 = vadd.f32 %v979, %v1001
        %s1010 = sld [smem:[#allocation3 + $0xf]]
        %v1011 = vstv %s1010
        %v1012 = vmul.f32 %v1011, %v982
        %v1013 = vmul.f32 %v1011, %v983
        %v1014 = vmul.f32 %v1011, %v984
        %v1015 = vmul.f32 %v1011, %v985
        %v1016 = vmul.f32 %v1011, %v986
        %v1017 = vmul.f32 %v1011, %v987
        %v1018 = vmul.f32 %v1011, %v988
        %v1019 = vmul.f32 %v1011, %v989
        %v1020 = vadd.f32 %v1002, %v1012
        %v1021 = vadd.f32 %v1003, %v1013
        %v1022 = vadd.f32 %v1004, %v1014
        %v1023 = vadd.f32 %v1005, %v1015
        %v1024 = vadd.f32 %v1006, %v1016
        %v1025 = vadd.f32 %v1007, %v1017
        %v1026 = vadd.f32 %v1008, %v1018
        %v1027 = vadd.f32 %v1009, %v1019
        %s1028 = sld [smem:[#allocation3 + $0x18]]
        %v1029 = vstv %s1028
        %v1030 = vmul.f32 %v1029, %v984
        %v1031 = vmul.f32 %v1029, %v985
        %v1032 = vmul.f32 %v1029, %v986
        %v1033 = vmul.f32 %v1029, %v987
        %v1034 = vmul.f32 %v1029, %v988
        %v1035 = vmul.f32 %v1029, %v989
        %v1036 = vmul.f32 %v1029, %v990
        %v1037 = vmul.f32 %v1029, %v991
        %v1038 = vadd.f32 %v1020, %v1030
        %v1039 = vadd.f32 %v1021, %v1031
        %v1040 = vadd.f32 %v1022, %v1032
        %v1041 = vadd.f32 %v1023, %v1033
        %v1042 = vadd.f32 %v1024, %v1034
        %v1043 = vadd.f32 %v1025, %v1035
        %v1044 = vadd.f32 %v1026, %v1036
        %v1045 = vadd.f32 %v1027, %v1037
        %s1046 = sld [smem:[#allocation3 + $0x7]]
        %v1047 = vstv %s1046
        %v1048 = vmul.f32 %v1047, %v980
        %v1049 = vmul.f32 %v1047, %v981
        %v1050 = vmul.f32 %v1047, %v982
        %v1051 = vmul.f32 %v1047, %v983
        %v1052 = vmul.f32 %v1047, %v984
        %v1053 = vmul.f32 %v1047, %v985
        %v1054 = vmul.f32 %v1047, %v986
        %v1055 = vmul.f32 %v1047, %v987
        %1064 = vrot.lane.b32.xlu0 %v1048, 127
        %v1065 = vpop.permute.xlu0 %1064
        %1066 = vrot.lane.b32.xlu0 %v1049, 127
        %v1067 = vpop.permute.xlu0 %1066
        %1068 = vrot.lane.b32.xlu0 %v1050, 127
        %v1069 = vpop.permute.xlu0 %1068
        %1070 = vrot.lane.b32.xlu0 %v1051, 127
        %v1071 = vpop.permute.xlu0 %1070
        %1072 = vrot.lane.b32.xlu0 %v1052, 127
        %v1073 = vpop.permute.xlu0 %1072
        %1074 = vrot.lane.b32.xlu0 %v1053, 127
        %v1075 = vpop.permute.xlu0 %1074
        %1076 = vrot.lane.b32.xlu0 %v1054, 127
        %v1077 = vpop.permute.xlu0 %1076
        %1078 = vrot.lane.b32.xlu0 %v1055, 127
        %v1079 = vpop.permute.xlu0 %1078
        %v1088 = vadd.f32 %v1038, %v1065
        %v1089 = vadd.f32 %v1039, %v1067
        %v1090 = vadd.f32 %v1040, %v1069
        %v1091 = vadd.f32 %v1041, %v1071
        %v1092 = vadd.f32 %v1042, %v1073
        %v1093 = vadd.f32 %v1043, %v1075
        %v1094 = vadd.f32 %v1044, %v1077
        %v1095 = vadd.f32 %v1045, %v1079
        %s1096 = sld [smem:[#allocation3 + $0x10]]
        %v1097 = vstv %s1096
        %v1098 = vmul.f32 %v1097, %v982
        %v1099 = vmul.f32 %v1097, %v983
        %v1100 = vmul.f32 %v1097, %v984
        %v1101 = vmul.f32 %v1097, %v985
        %v1102 = vmul.f32 %v1097, %v986
        %v1103 = vmul.f32 %v1097, %v987
        %v1104 = vmul.f32 %v1097, %v988
        %v1105 = vmul.f32 %v1097, %v989
        %1114 = vrot.lane.b32.xlu0 %v1098, 127
        %v1115 = vpop.permute.xlu0 %1114
        %1116 = vrot.lane.b32.xlu0 %v1099, 127
        %v1117 = vpop.permute.xlu0 %1116
        %1118 = vrot.lane.b32.xlu0 %v1100, 127
        %v1119 = vpop.permute.xlu0 %1118
        %1120 = vrot.lane.b32.xlu0 %v1101, 127
        %v1121 = vpop.permute.xlu0 %1120
        %1122 = vrot.lane.b32.xlu0 %v1102, 127
        %v1123 = vpop.permute.xlu0 %1122
        %1124 = vrot.lane.b32.xlu0 %v1103, 127
        %v1125 = vpop.permute.xlu0 %1124
        %1126 = vrot.lane.b32.xlu0 %v1104, 127
        %v1127 = vpop.permute.xlu0 %1126
        %1128 = vrot.lane.b32.xlu0 %v1105, 127
        %v1129 = vpop.permute.xlu0 %1128
        %v1138 = vadd.f32 %v1088, %v1115
        %v1139 = vadd.f32 %v1089, %v1117
        %v1140 = vadd.f32 %v1090, %v1119
        %v1141 = vadd.f32 %v1091, %v1121
        %v1142 = vadd.f32 %v1092, %v1123
        %v1143 = vadd.f32 %v1093, %v1125
        %v1144 = vadd.f32 %v1094, %v1127
        %v1145 = vadd.f32 %v1095, %v1129
        %s1146 = sld [smem:[#allocation3 + $0x19]]
        %v1147 = vstv %s1146
        %v1148 = vmul.f32 %v1147, %v984
        %v1149 = vmul.f32 %v1147, %v985
        %v1150 = vmul.f32 %v1147, %v986
        %v1151 = vmul.f32 %v1147, %v987
        %v1152 = vmul.f32 %v1147, %v988
        %v1153 = vmul.f32 %v1147, %v989
        %v1154 = vmul.f32 %v1147, %v990
        %v1155 = vmul.f32 %v1147, %v991
        %1164 = vrot.lane.b32.xlu0 %v1148, 127
        %v1165 = vpop.permute.xlu0 %1164
        %1166 = vrot.lane.b32.xlu0 %v1149, 127
        %v1167 = vpop.permute.xlu0 %1166
        %1168 = vrot.lane.b32.xlu0 %v1150, 127
        %v1169 = vpop.permute.xlu0 %1168
        %1170 = vrot.lane.b32.xlu0 %v1151, 127
        %v1171 = vpop.permute.xlu0 %1170
        %1172 = vrot.lane.b32.xlu0 %v1152, 127
        %v1173 = vpop.permute.xlu0 %1172
        %1174 = vrot.lane.b32.xlu0 %v1153, 127
        %v1175 = vpop.permute.xlu0 %1174
        %1176 = vrot.lane.b32.xlu0 %v1154, 127
        %v1177 = vpop.permute.xlu0 %1176
        %1178 = vrot.lane.b32.xlu0 %v1155, 127
        %v1179 = vpop.permute.xlu0 %1178
        %v1188 = vadd.f32 %v1138, %v1165
        %v1189 = vadd.f32 %v1139, %v1167
        %v1190 = vadd.f32 %v1140, %v1169
        %v1191 = vadd.f32 %v1141, %v1171
        %v1192 = vadd.f32 %v1142, %v1173
        %v1193 = vadd.f32 %v1143, %v1175
        %v1194 = vadd.f32 %v1144, %v1177
        %v1195 = vadd.f32 %v1145, %v1179
        %s1196 = sld [smem:[#allocation3 + $0x8]]
        %v1197 = vstv %s1196
        %v1198 = vmul.f32 %v1197, %v980
        %v1199 = vmul.f32 %v1197, %v981
        %v1200 = vmul.f32 %v1197, %v982
        %v1201 = vmul.f32 %v1197, %v983
        %v1202 = vmul.f32 %v1197, %v984
        %v1203 = vmul.f32 %v1197, %v985
        %v1204 = vmul.f32 %v1197, %v986
        %v1205 = vmul.f32 %v1197, %v987
        %1214 = vrot.lane.b32.xlu0 %v1198, 126
        %v1215 = vpop.permute.xlu0 %1214
        %1216 = vrot.lane.b32.xlu0 %v1199, 126
        %v1217 = vpop.permute.xlu0 %1216
        %1218 = vrot.lane.b32.xlu0 %v1200, 126
        %v1219 = vpop.permute.xlu0 %1218
        %1220 = vrot.lane.b32.xlu0 %v1201, 126
        %v1221 = vpop.permute.xlu0 %1220
        %1222 = vrot.lane.b32.xlu0 %v1202, 126
        %v1223 = vpop.permute.xlu0 %1222
        %1224 = vrot.lane.b32.xlu0 %v1203, 126
        %v1225 = vpop.permute.xlu0 %1224
        %1226 = vrot.lane.b32.xlu0 %v1204, 126
        %v1227 = vpop.permute.xlu0 %1226
        %1228 = vrot.lane.b32.xlu0 %v1205, 126
        %v1229 = vpop.permute.xlu0 %1228
        %v1238 = vadd.f32 %v1188, %v1215
        %v1239 = vadd.f32 %v1189, %v1217
        %v1240 = vadd.f32 %v1190, %v1219
        %v1241 = vadd.f32 %v1191, %v1221
        %v1242 = vadd.f32 %v1192, %v1223
        %v1243 = vadd.f32 %v1193, %v1225
        %v1244 = vadd.f32 %v1194, %v1227
        %v1245 = vadd.f32 %v1195, %v1229
        %s1246 = sld [smem:[#allocation3 + $0x11]]
        %v1247 = vstv %s1246
        %v1248 = vmul.f32 %v1247, %v982
        %v1249 = vmul.f32 %v1247, %v983
        %v1250 = vmul.f32 %v1247, %v984
        %v1251 = vmul.f32 %v1247, %v985
        %v1252 = vmul.f32 %v1247, %v986
        %v1253 = vmul.f32 %v1247, %v987
        %v1254 = vmul.f32 %v1247, %v988
        %v1255 = vmul.f32 %v1247, %v989
        %1264 = vrot.lane.b32.xlu0 %v1248, 126
        %v1265 = vpop.permute.xlu0 %1264
        %1266 = vrot.lane.b32.xlu0 %v1249, 126
        %v1267 = vpop.permute.xlu0 %1266
        %1268 = vrot.lane.b32.xlu0 %v1250, 126
        %v1269 = vpop.permute.xlu0 %1268
        %1270 = vrot.lane.b32.xlu0 %v1251, 126
        %v1271 = vpop.permute.xlu0 %1270
        %1272 = vrot.lane.b32.xlu0 %v1252, 126
        %v1273 = vpop.permute.xlu0 %1272
        %1274 = vrot.lane.b32.xlu0 %v1253, 126
        %v1275 = vpop.permute.xlu0 %1274
        %1276 = vrot.lane.b32.xlu0 %v1254, 126
        %v1277 = vpop.permute.xlu0 %1276
        %1278 = vrot.lane.b32.xlu0 %v1255, 126
        %v1279 = vpop.permute.xlu0 %1278
        %v1288 = vadd.f32 %v1238, %v1265
        %v1289 = vadd.f32 %v1239, %v1267
        %v1290 = vadd.f32 %v1240, %v1269
        %v1291 = vadd.f32 %v1241, %v1271
        %v1292 = vadd.f32 %v1242, %v1273
        %v1293 = vadd.f32 %v1243, %v1275
        %v1294 = vadd.f32 %v1244, %v1277
        %v1295 = vadd.f32 %v1245, %v1279
        %s1296 = sld [smem:[#allocation3 + $0x1a]]
        %v1297 = vstv %s1296
        %v1298 = vmul.f32 %v1297, %v984
        %v1299 = vmul.f32 %v1297, %v985
        %v1300 = vmul.f32 %v1297, %v986
        %v1301 = vmul.f32 %v1297, %v987
        %v1302 = vmul.f32 %v1297, %v988
        %v1303 = vmul.f32 %v1297, %v989
        %v1304 = vmul.f32 %v1297, %v990
        %v1305 = vmul.f32 %v1297, %v991
        %1314 = vrot.lane.b32.xlu0 %v1298, 126
        %v1315 = vpop.permute.xlu0 %1314
        %1316 = vrot.lane.b32.xlu0 %v1299, 126
        %v1317 = vpop.permute.xlu0 %1316
        %1318 = vrot.lane.b32.xlu0 %v1300, 126
        %v1319 = vpop.permute.xlu0 %1318
        %1320 = vrot.lane.b32.xlu0 %v1301, 126
        %v1321 = vpop.permute.xlu0 %1320
        %1322 = vrot.lane.b32.xlu0 %v1302, 126
        %v1323 = vpop.permute.xlu0 %1322
        %1324 = vrot.lane.b32.xlu0 %v1303, 126
        %v1325 = vpop.permute.xlu0 %1324
        %1326 = vrot.lane.b32.xlu0 %v1304, 126
        %v1327 = vpop.permute.xlu0 %1326
        %1328 = vrot.lane.b32.xlu0 %v1305, 126
        %v1329 = vpop.permute.xlu0 %1328
        %v1338 = vadd.f32 %v1288, %v1315
        %v1339 = vadd.f32 %v1289, %v1317
        %v1340 = vadd.f32 %v1290, %v1319
        %v1341 = vadd.f32 %v1291, %v1321
        %v1342 = vadd.f32 %v1292, %v1323
        %v1343 = vadd.f32 %v1293, %v1325
        %v1344 = vadd.f32 %v1294, %v1327
        %v1345 = vadd.f32 %v1295, %v1329
        %s1346 = sld [smem:[#allocation3 + $0x1b]]
        %v1347 = vstv %s1346
        %v1348 = vadd.f32 %v1338, %v1347
        %v1349 = vadd.f32 %v1339, %v1347
        %v1350 = vadd.f32 %v1340, %v1347
        %v1351 = vadd.f32 %v1341, %v1347
        %v1352 = vadd.f32 %v1342, %v1347
        %v1353 = vadd.f32 %v1343, %v1347
        %v1354 = vadd.f32 %v1344, %v1347
        %v1355 = vadd.f32 %v1345, %v1347
        %s1356 = sld [smem:[#allocation3 + $0x1c]]
        %v1357 = vsub.f32 0.0, %v1348
        %v1358 = vsub.f32 0.0, %v1349
        %v1359 = vsub.f32 0.0, %v1350
        %v1360 = vsub.f32 0.0, %v1351
        %v1361 = vsub.f32 0.0, %v1352
        %v1362 = vsub.f32 0.0, %v1353
        %v1363 = vsub.f32 0.0, %v1354
        %v1364 = vsub.f32 0.0, %v1355
        %v1365 = vmul.f32 %v1357, 1.442695
        %v1366 = vpow.pop %v1365
        %v1367 = vmul.f32 %v1358, 1.442695
        %v1368 = vpow.pop %v1367
        %v1369 = vmul.f32 %v1359, 1.442695
        %v1370 = vpow.pop %v1369
        %v1371 = vmul.f32 %v1360, 1.442695
        %v1372 = vpow.pop %v1371
        %v1373 = vmul.f32 %v1361, 1.442695
        %v1374 = vpow.pop %v1373
        %v1375 = vmul.f32 %v1362, 1.442695
        %v1376 = vpow.pop %v1375
        %v1377 = vmul.f32 %v1363, 1.442695
        %v1378 = vpow.pop %v1377
        %v1379 = vmul.f32 %v1364, 1.442695
        %v1380 = vpow.pop %v1379
        %v1381 = vadd.f32 %v1366, 1.0
        %v1382 = vadd.f32 %v1368, 1.0
        %v1383 = vadd.f32 %v1370, 1.0
        %v1384 = vadd.f32 %v1372, 1.0
        %v1385 = vadd.f32 %v1374, 1.0
        %v1386 = vadd.f32 %v1376, 1.0
        %v1387 = vadd.f32 %v1378, 1.0
        %v1388 = vadd.f32 %v1380, 1.0
        %v1389 = vrcp.pop %v1381
        %v1390 = vmul.f32 %v1381, %v1389
        %v1391 = vsub.f32 1.0, %v1390
        %v1392 = vmul.f32 %v1389, %v1391
        %v1393 = vadd.f32 %v1389, %v1392
        %vm1394 = vweird.f32 %v1381
        %vm1395 = vweird.f32 %v1389
        %vm1396 = vmor %vm1394, %vm1395
        %v1397 = vsel %vm1396, %v1389, %v1393
        %v1398 = vand.u32 2147483647, %v1381
        %vm1399 = vcmp.eq.f32.partialorder %v1398, 8.507059e+37
        %v1400 = vand.u32 %v1381, 2147483648
        %v1401 = vor.u32 1.1754944e-38, %v1400
        %v1402 = vsel %vm1399, %v1401, %v1397
        %v1403 = vrcp.pop %v1382
        %v1404 = vmul.f32 %v1382, %v1403
        %v1405 = vsub.f32 1.0, %v1404
        %v1406 = vmul.f32 %v1403, %v1405
        %v1407 = vadd.f32 %v1403, %v1406
        %vm1408 = vweird.f32 %v1382
        %vm1409 = vweird.f32 %v1403
        %vm1410 = vmor %vm1408, %vm1409
        %v1411 = vsel %vm1410, %v1403, %v1407
        %v1412 = vand.u32 2147483647, %v1382
        %vm1413 = vcmp.eq.f32.partialorder %v1412, 8.507059e+37
        %v1414 = vand.u32 %v1382, 2147483648
        %v1415 = vor.u32 1.1754944e-38, %v1414
        %v1416 = vsel %vm1413, %v1415, %v1411
        %v1417 = vrcp.pop %v1383
        %v1418 = vmul.f32 %v1383, %v1417
        %v1419 = vsub.f32 1.0, %v1418
        %v1420 = vmul.f32 %v1417, %v1419
        %v1421 = vadd.f32 %v1417, %v1420
        %vm1422 = vweird.f32 %v1383
        %vm1423 = vweird.f32 %v1417
        %vm1424 = vmor %vm1422, %vm1423
        %v1425 = vsel %vm1424, %v1417, %v1421
        %v1426 = vand.u32 2147483647, %v1383
        %vm1427 = vcmp.eq.f32.partialorder %v1426, 8.507059e+37
        %v1428 = vand.u32 %v1383, 2147483648
        %v1429 = vor.u32 1.1754944e-38, %v1428
        %v1430 = vsel %vm1427, %v1429, %v1425
        %v1431 = vrcp.pop %v1384
        %v1432 = vmul.f32 %v1384, %v1431
        %v1433 = vsub.f32 1.0, %v1432
        %v1434 = vmul.f32 %v1431, %v1433
        %v1435 = vadd.f32 %v1431, %v1434
        %vm1436 = vweird.f32 %v1384
        %vm1437 = vweird.f32 %v1431
        %vm1438 = vmor %vm1436, %vm1437
        %v1439 = vsel %vm1438, %v1431, %v1435
        %v1440 = vand.u32 2147483647, %v1384
        %vm1441 = vcmp.eq.f32.partialorder %v1440, 8.507059e+37
        %v1442 = vand.u32 %v1384, 2147483648
        %v1443 = vor.u32 1.1754944e-38, %v1442
        %v1444 = vsel %vm1441, %v1443, %v1439
        %v1445 = vrcp.pop %v1385
        %v1446 = vmul.f32 %v1385, %v1445
        %v1447 = vsub.f32 1.0, %v1446
        %v1448 = vmul.f32 %v1445, %v1447
        %v1449 = vadd.f32 %v1445, %v1448
        %vm1450 = vweird.f32 %v1385
        %vm1451 = vweird.f32 %v1445
        %vm1452 = vmor %vm1450, %vm1451
        %v1453 = vsel %vm1452, %v1445, %v1449
        %v1454 = vand.u32 2147483647, %v1385
        %vm1455 = vcmp.eq.f32.partialorder %v1454, 8.507059e+37
        %v1456 = vand.u32 %v1385, 2147483648
        %v1457 = vor.u32 1.1754944e-38, %v1456
        %v1458 = vsel %vm1455, %v1457, %v1453
        %v1459 = vrcp.pop %v1386
        %v1460 = vmul.f32 %v1386, %v1459
        %v1461 = vsub.f32 1.0, %v1460
        %v1462 = vmul.f32 %v1459, %v1461
        %v1463 = vadd.f32 %v1459, %v1462
        %vm1464 = vweird.f32 %v1386
        %vm1465 = vweird.f32 %v1459
        %vm1466 = vmor %vm1464, %vm1465
        %v1467 = vsel %vm1466, %v1459, %v1463
        %v1468 = vand.u32 2147483647, %v1386
        %vm1469 = vcmp.eq.f32.partialorder %v1468, 8.507059e+37
        %v1470 = vand.u32 %v1386, 2147483648
        %v1471 = vor.u32 1.1754944e-38, %v1470
        %v1472 = vsel %vm1469, %v1471, %v1467
        %v1473 = vrcp.pop %v1387
        %v1474 = vmul.f32 %v1387, %v1473
        %v1475 = vsub.f32 1.0, %v1474
        %v1476 = vmul.f32 %v1473, %v1475
        %v1477 = vadd.f32 %v1473, %v1476
        %vm1478 = vweird.f32 %v1387
        %vm1479 = vweird.f32 %v1473
        %vm1480 = vmor %vm1478, %vm1479
        %v1481 = vsel %vm1480, %v1473, %v1477
        %v1482 = vand.u32 2147483647, %v1387
        %vm1483 = vcmp.eq.f32.partialorder %v1482, 8.507059e+37
        %v1484 = vand.u32 %v1387, 2147483648
        %v1485 = vor.u32 1.1754944e-38, %v1484
        %v1486 = vsel %vm1483, %v1485, %v1481
        %v1487 = vrcp.pop %v1388
        %v1488 = vmul.f32 %v1388, %v1487
        %v1489 = vsub.f32 1.0, %v1488
        %v1490 = vmul.f32 %v1487, %v1489
        %v1491 = vadd.f32 %v1487, %v1490
        %vm1492 = vweird.f32 %v1388
        %vm1493 = vweird.f32 %v1487
        %vm1494 = vmor %vm1492, %vm1493
        %v1495 = vsel %vm1494, %v1487, %v1491
        %v1496 = vand.u32 2147483647, %v1388
        %vm1497 = vcmp.eq.f32.partialorder %v1496, 8.507059e+37
        %v1498 = vand.u32 %v1388, 2147483648
        %v1499 = vor.u32 1.1754944e-38, %v1498
        %v1500 = vsel %vm1497, %v1499, %v1495
        %v1501 = vstv %s1356
        %v1502 = vmul.f32 %v1501, %v1402
        %v1503 = vmul.f32 %v1501, %v1416
        %v1504 = vmul.f32 %v1501, %v1430
        %v1505 = vmul.f32 %v1501, %v1444
        %v1506 = vmul.f32 %v1501, %v1458
        %v1507 = vmul.f32 %v1501, %v1472
        %v1508 = vmul.f32 %v1501, %v1486
        %v1509 = vmul.f32 %v1501, %v1500
        %v1510 = vmul.f32 %v178, %v1502
        %v1511 = vmul.f32 %v179, %v1503
        %v1512 = vmul.f32 %v180, %v1504
        %v1513 = vmul.f32 %v181, %v1505
        %v1514 = vmul.f32 %v182, %v1506
        %v1515 = vmul.f32 %v183, %v1507
        %v1516 = vmul.f32 %v184, %v1508
        %v1517 = vmul.f32 %v185, %v1509
        %v1518 = vadd.f32 %v1510, %v178
        %v1519 = vadd.f32 %v1511, %v179
        %v1520 = vadd.f32 %v1512, %v180
        %v1521 = vadd.f32 %v1513, %v181
        %v1522 = vadd.f32 %v1514, %v182
        %v1523 = vadd.f32 %v1515, %v183
        %v1524 = vadd.f32 %v1516, %v184
        %v1525 = vadd.f32 %v1517, %v185
        %vm1526 = vcmask 130048
        %1527 = vst.msk [vmem:[%s177] sm:$0xff] %vm1526, %v1518
        %1528 = vst.msk [vmem:[%s177 + $0x8] sm:$0xff] %vm1526, %v1519
        %1529 = vst.msk [vmem:[%s177 + $0x10] sm:$0xff] %vm1526, %v1520
        %1530 = vst.msk [vmem:[%s177 + $0x18] sm:$0xff] %vm1526, %v1521
        %1531 = vst.msk [vmem:[%s177 + $0x20] sm:$0xff] %vm1526, %v1522
        %1532 = vst.msk [vmem:[%s177 + $0x28] sm:$0xff] %vm1526, %v1523
        %1533 = vst.msk [vmem:[%s177 + $0x30] sm:$0xff] %vm1526, %v1524
        %1534 = vst.msk [vmem:[%s177 + $0x38] sm:$0xff] %vm1526, %v1525
        %s1535 = sand.u32 %s75, 1
        %s1536 = scalar_lea.sflag [#allocation5], %s1535
        %s1537 = sand.u32 %s75, 1
        %s1538 = smul.addr %s1537, 64
        %s1539 = scalar_lea.vmem [#allocation8], %s1538
        // Predicated region
        $region37: #{tpu_custom_call.1} parent=27 // pred_check
          %p1540 = pneg %p85
        $region38: #{tpu_custom_call.1} parent=27 // pred_check_branch
          %1542 = sbr.rel (%p1540) target = $region40
        $region39: #{tpu_custom_call.1} parent=27 // pred_region
          %1544 = vsyncadd %s1536, 0
          %s1545 = smul.addr %s20, 8
          %s1546 = smul.addr %s1545, 8
          %s1547 = scalar_lea.hbm %s2, %s1546
          %s1548 = sshll.u32 %s1539, 4
          %s1549 = int_to_ptr.vmem [resolvable:$true] %s1548
          %s1550 = sshll.u32 %s1547, 4
          %s1551 = int_to_ptr.hbm [resolvable:$true] %s1550
          %1556 = dma.vmem_to_hbm [thread:$0]  %s1549, 1024, %s1551, %s1536, 128, 128, 8
        $region40: #{tpu_custom_call.1} parent=27 // pred_fallthru
          _
      $region28: #{tpu_custom_call.1} parent=5 // pred_fallthru
        _
      %p1557 = scmp.le.s32.totalorder 2, %s15
      // Predicated region
      $region41: #{tpu_custom_call.1} parent=5 // pred_check
        %p1558 = pneg %p1557
      $region42: #{tpu_custom_call.1} parent=5 // pred_check_branch
        %1560 = sbr.rel (%p1558) target = $region44
      $region43: #{tpu_custom_call.1} parent=5 // pred_region
        %s1561 = ssub.s32 %s15, 2
        // Predicated region
        $region45: #{tpu_custom_call.1} parent=43 // pred_check
          %p1562 = pneg %p91
        $region46: #{tpu_custom_call.1} parent=43 // pred_check_branch
          %1564 = sbr.rel (%p1562) target = $region48
        $region47: #{tpu_custom_call.1} parent=43 // pred_region
          %s1565 = sand.u32 %s76, 1
          %s1566 = scalar_lea.sflag [#allocation5], %s1565
          %s1567 = sand.u32 %s76, 1
          %s1568 = smul.addr %s1567, 64
          %s1569 = scalar_lea.vmem [#allocation8], %s1568
          %1571 = dma.done %s1566, 1024
        $region48: #{tpu_custom_call.1} parent=43 // pred_fallthru
          _
      $region44: #{tpu_custom_call.1} parent=5 // pred_fallthru
        _
    $region6: #{tpu_custom_call.1} parent=1 // loop_footer
      %s19 = sadd.s32 1, %s15
    $region7: #{tpu_custom_call.1} parent=1 // loop_footer_branch
      %14 = sbr.rel target = $region3
    $region8: #{tpu_custom_call.1} parent=1 // loop_exit
      _
    %1572 = vsyncpa [#allocation4], 1
    %s1573 = scalar_lea.sflag [#allocation4], 1
    %1574 = vsyncpa %s1573, 1
    %1575 = vsyncpa [#allocation5], 1
    %s1576 = scalar_lea.sflag [#allocation5], 1
    %1577 = vsyncpa %s1576, 1
    %1578 = vsyncpa [#allocation6], 1
    %s1579 = scalar_lea.sflag [#allocation6], 1
    %1580 = vsyncpa %s1579, 1

</llo_original>
